<compile_context>
chip_gen: v7x
topology: tpu7x:2x2x1
jax: 0.10.0
libtpu: 0.0.40
codegen_flags: <defaults>
</compile_context>

<pallas_src>
import functools

import jax
import jax.numpy as jnp
from jax.experimental import pallas as pl
from jax.experimental.pallas import tpu as pltpu


def _round_up(x, m):
    return ((x + m - 1) // m) * m


# --------------------------------------------------------------------------
# Kernels
# --------------------------------------------------------------------------
def qkv_proj_kernel(x_ref, w_ref, b_ref, v_ref, q_ref, k_ref):
    """Fused 1x1-conv projections for one row tile: [v | q | k] = x @ W + b."""
    x = x_ref[...].astype(jnp.bfloat16)            # (TQ, C)
    w = w_ref[...]                                 # (C, C + 2*c8p) bf16 (pre-cast)
    vqk = jnp.dot(x, w, preferred_element_type=jnp.float32) + b_ref[...]
    c = v_ref.shape[-1]
    c8p = q_ref.shape[-1]
    # Slice boundaries are multiples of 128 when C % 128 == 0 -> no cross-lane shuffles.
    v_ref[...] = vqk[:, :c].astype(v_ref.dtype)
    q_ref[...] = vqk[:, c:c + c8p].astype(q_ref.dtype)
    k_ref[...] = vqk[:, c + c8p:].astype(k_ref.dtype)


def attention_kernel(q_ref, k_ref, v_ref, x_ref, gamma_ref, out_ref, attn_ref):
    """One query-row tile of attention: softmax(q k^T) v, residual epilogue."""
    q = q_ref[...]                                 # (TQ, c8p) bf16
    k = k_ref[...]                                 # (N,  c8p) bf16 (resident)
    v = v_ref[...]                                 # (N,  C)   bf16 (resident)

    # energy[i, j] = <q_i, k_j>  — contract last dims, f32 MXU accumulation.
    # (padded channels are exact zeros, so they contribute nothing.)
    energy = jax.lax.dot_general(
        q, k, (((1,), (1,)), ((), ())),
        preferred_element_type=jnp.float32)        # (TQ, N) f32

    # Numerically-stable softmax over keys, all in f32.
    m = jnp.max(energy, axis=-1, keepdims=True)
    e = jnp.exp(energy - m)
    denom = jnp.sum(e, axis=-1, keepdims=True)
    attn = e * pl.reciprocal(denom, approx=True)   # EUP reciprocal instead of N^2 divides
    attn_ref[...] = attn

    ctx = jnp.dot(attn.astype(jnp.bfloat16), v,
                  preferred_element_type=jnp.float32)          # (TQ, C) f32
    gamma = gamma_ref[0, 0]
    out_ref[...] = gamma * ctx + x_ref[...]        # residual epilogue in f32


# --------------------------------------------------------------------------
# Wrapper
# --------------------------------------------------------------------------
def _pick_block_q(n):
    # 256 matches the v6e/v7x 2x256^2 MXU; 128 is enough for v5e's 4x128^2.
    for bq in (256, 128, 64, 32, 16, 8):
        if n % bq == 0:
            return bq
    return n


def self_attention(x, params, *, block_q=None,
                   vmem_limit_bytes=48 * 1024 * 1024):
    """x: (N, C) float32.  Returns (out (N,C), attention (1,N,N), gamma, gamma_att)."""
    N, C = x.shape
    wq, bq, wk, bk, wv, bv, gamma, gamma_att = params
    c8 = wq.shape[1]
    c8p = _round_up(c8, 128)          # lane-aligned q/k width (zero-padded)
    if block_q is None:
        block_q = _pick_block_q(N)
    assert N % block_q == 0, "N must be divisible by block_q"
    grid = (N // block_q,)

    # Fused projection weights, q/k columns zero-padded to c8p, pre-cast to bf16.
    pad = c8p - c8
    wq_p = jnp.pad(wq, ((0, 0), (0, pad)))
    wk_p = jnp.pad(wk, ((0, 0), (0, pad)))
    bq_p = jnp.pad(bq, ((0, 0), (0, pad)))
    bk_p = jnp.pad(bk, ((0, 0), (0, pad)))
    w_vqk = jnp.concatenate([wv, wq_p, wk_p], axis=1).astype(jnp.bfloat16)  # (C, C+2*c8p)
    b_vqk = jnp.concatenate([bv, bq_p, bk_p], axis=1)                       # (1, C+2*c8p) f32
    d_out = C + 2 * c8p

    cparams = pltpu.CompilerParams(
        dimension_semantics=("parallel",),
        vmem_limit_bytes=vmem_limit_bytes)

    # ---- Call 1: fused q/k/v projection (computed exactly once) -----------
    v, q, k = pl.pallas_call(
        qkv_proj_kernel,
        grid=grid,
        in_specs=[
            pl.BlockSpec((block_q, C), lambda i: (i, 0)),
            pl.BlockSpec((C, d_out), lambda i: (0, 0)),
            pl.BlockSpec((1, d_out), lambda i: (0, 0)),
        ],
        out_specs=(
            pl.BlockSpec((block_q, C), lambda i: (i, 0)),
            pl.BlockSpec((block_q, c8p), lambda i: (i, 0)),
            pl.BlockSpec((block_q, c8p), lambda i: (i, 0)),
        ),
        out_shape=(
            jax.ShapeDtypeStruct((N, C), jnp.bfloat16),
            jax.ShapeDtypeStruct((N, c8p), jnp.bfloat16),
            jax.ShapeDtypeStruct((N, c8p), jnp.bfloat16),
        ),
        compiler_params=cparams,
    )(x, w_vqk, b_vqk)

    # ---- Call 2: attention over query-row tiles ----------------------------
    out, attn = pl.pallas_call(
        attention_kernel,
        grid=grid,
        in_specs=[
            pl.BlockSpec((block_q, c8p), lambda i: (i, 0)),  # q tile
            pl.BlockSpec((N, c8p), lambda i: (0, 0)),        # k (VMEM resident)
            pl.BlockSpec((N, C), lambda i: (0, 0)),          # v (VMEM resident)
            pl.BlockSpec((block_q, C), lambda i: (i, 0)),    # x tile (residual)
            pl.BlockSpec(memory_space=pltpu.MemorySpace.SMEM),  # gamma scalar
        ],
        out_specs=(
            pl.BlockSpec((block_q, C), lambda i: (i, 0)),
            pl.BlockSpec((block_q, N), lambda i: (i, 0)),    # lane-dense when N%128==0
        ),
        out_shape=(
            jax.ShapeDtypeStruct((N, C), jnp.float32),
            jax.ShapeDtypeStruct((N, N), jnp.float32),
        ),
        compiler_params=cparams,
    )(q, k, v, x, gamma.reshape(1, 1).astype(jnp.float32))

    # torch returns attention with the (size-1) batch dim kept.
    return out, attn.reshape(1, N, N), gamma, gamma_att


# --------------------------------------------------------------------------
# Parameters + reference
# --------------------------------------------------------------------------
def make_params(key, in_dim):
    """Deterministic synthetic parameters matching the torch module's shapes."""
    assert in_dim % 8 == 0
    c8 = in_dim // 8
    ks = jax.random.split(key, 6)
    scale = 1.0 / jnp.sqrt(in_dim)
    # stored transposed to (C_in, C_out) for the kernel (torch weight is (C_out, C_in, 1))
    wq = jax.random.normal(ks[0], (in_dim, c8), jnp.float32) * scale
    bq = jax.random.normal(ks[1], (1, c8), jnp.float32) * scale
    wk = jax.random.normal(ks[2], (in_dim, c8), jnp.float32) * scale
    bk = jax.random.normal(ks[3], (1, c8), jnp.float32) * scale
    wv = jax.random.normal(ks[4], (in_dim, in_dim), jnp.float32) * scale
    bv = jax.random.normal(ks[5], (1, in_dim), jnp.float32) * scale
    gamma = jnp.zeros((1,), jnp.float32)       # nn.Parameter(torch.zeros(1))
    gamma_att = jnp.ones((1,), jnp.float32)    # nn.Parameter(torch.ones(1)) -- unused in fwd
    return wq, bq, wk, bk, wv, bv, gamma, gamma_att


def self_attention_ref(x, params, matmul_dtype=jnp.float32):
    """Plain-JAX reference mirroring the torch forward.

    With matmul_dtype=jnp.bfloat16 it mirrors the kernel's mixed precision
    (bf16 matmul operands, f32 accumulation, f32 softmax/epilogue).
    """
    wq, bq, wk, bk, wv, bv, gamma, gamma_att = params
    md = matmul_dtype
    C = x.shape[1]
    c8 = wq.shape[1]
    w_vqk = jnp.concatenate([wv, wq, wk], axis=1).astype(md)
    b_vqk = jnp.concatenate([bv, bq, bk], axis=1)
    vqk = jnp.dot(x.astype(md), w_vqk, preferred_element_type=jnp.float32) + b_vqk
    v = vqk[:, :C].astype(md)
    q = vqk[:, C:C + c8].astype(md)
    k = vqk[:, C + c8:].astype(md)
    energy = jax.lax.dot_general(q, k, (((1,), (1,)), ((), ())),
                                 preferred_element_type=jnp.float32)
    attn = jax.nn.softmax(energy, axis=-1)
    out = gamma[0] * jnp.dot(attn.astype(md), v,
                             preferred_element_type=jnp.float32) + x
    return out, attn, gamma, gamma_att


# --------------------------------------------------------------------------
if __name__ == "__main__":
    N, C = 256, 128                      # num instances, in_dim  (C // 8 == 16)
    key = jax.random.PRNGKey(0)
    k_x, k_p = jax.random.split(key)
    x = jax.random.normal(k_x, (N, C), jnp.float32)
    params = make_params(k_p, C)
    # torch initializes gamma to 0 (out == x exactly); use a nonzero gamma so
    # the attention epilogue is actually exercised by the numerical check.
    params = params[:6] + (jnp.full((1,), 0.5, jnp.float32), params[7])

    # block_q=128 -> grid of 2 query tiles (exercises tiling + resident k/v).
    fn = jax.jit(functools.partial(self_attention, block_q=128))
    out, attn, gamma, gamma_att = fn(x, params)
    jax.block_until_ready((out, attn))

    # Reference mirrors the kernel's bf16-operand / f32-accumulate matmuls;
    # tolerance covers the approximate EUP reciprocal in the softmax.
    out_ref, attn_ref, _, _ = self_attention_ref(x, params, matmul_dtype=jnp.bfloat16)
    assert out.shape == (N, C) and attn.shape == (1, N, N)
    assert jnp.allclose(attn[0], attn_ref, atol=1e-2, rtol=1e-2), \
        float(jnp.max(jnp.abs(attn[0] - attn_ref)))
    assert jnp.allclose(out, out_ref, atol=1e-2, rtol=1e-2), \
        float(jnp.max(jnp.abs(out - out_ref)))

    print("KERNEL_OK")
</pallas_src>

<mosaic_0001>
module attributes {stable_mosaic.version = 11 : i64} {
  func.func @qkv_proj_kernel(%arg0: i32, %arg1: memref<128x128xf32, #tpu.memory_space<vmem>>, %arg2: memref<128x384xbf16, #tpu.memory_space<vmem>>, %arg3: memref<1x384xf32, #tpu.memory_space<vmem>>, %arg4: memref<128x128xbf16, #tpu.memory_space<vmem>>, %arg5: memref<128x128xbf16, #tpu.memory_space<vmem>>, %arg6: memref<128x128xbf16, #tpu.memory_space<vmem>>) attributes {dimension_semantics = [#tpu.dimension_semantics<parallel>], iteration_bounds = array<i64: 2>, scalar_prefetch = 0 : i64, scratch_operands = 0 : i64, tpu.core_type = #tpu.core_type<tc>, window_params = [{transform_indices = @transform_0, window_bounds = array<i64: 128, 128>}, {pipeline_mode = #tpu.pipeline_mode<synchronous>, transform_indices = @transform_1, window_bounds = array<i64: 128, 384>}, {pipeline_mode = #tpu.pipeline_mode<synchronous>, transform_indices = @transform_2, window_bounds = array<i64: 1, 384>}, {transform_indices = @transform_3, window_bounds = array<i64: 128, 128>}, {transform_indices = @transform_4, window_bounds = array<i64: 128, 128>}, {transform_indices = @transform_5, window_bounds = array<i64: 128, 128>}]} {
    %c0 = arith.constant 0 : index
    %c0_0 = arith.constant 0 : index
    %0 = vector.load %arg1[%c0, %c0_0] : memref<128x128xf32, #tpu.memory_space<vmem>>, vector<128x128xf32>
    %1 = arith.truncf %0 : vector<128x128xf32> to vector<128x128xbf16>
    %c0_1 = arith.constant 0 : index
    %c0_2 = arith.constant 0 : index
    %2 = vector.load %arg2[%c0_1, %c0_2] : memref<128x384xbf16, #tpu.memory_space<vmem>>, vector<128x384xbf16>
    %cst = arith.constant dense<0.000000e+00> : vector<128x384xf32>
    %3 = tpu.matmul %1, %2, %cst {dimension_numbers = #tpu.dot_dimension_numbers<[1], [0], [0], [1], [0, 0, 1, 1], [], []>} : vector<128x128xbf16>, vector<128x384xbf16>, vector<128x384xf32> -> vector<128x384xf32>
    %c0_3 = arith.constant 0 : index
    %c0_4 = arith.constant 0 : index
    %4 = vector.load %arg3[%c0_3, %c0_4] : memref<1x384xf32, #tpu.memory_space<vmem>>, vector<1x384xf32>
    %5 = vector.broadcast %4 : vector<1x384xf32> to vector<128x384xf32>
    %6 = arith.addf %3, %5 : vector<128x384xf32>
    %7 = vector.extract_strided_slice %6 {offsets = [0, 0], sizes = [128, 128], strides = [1, 1]} : vector<128x384xf32> to vector<128x128xf32>
    %8 = arith.truncf %7 : vector<128x128xf32> to vector<128x128xbf16>
    %c0_5 = arith.constant 0 : index
    %c0_6 = arith.constant 0 : index
    %9 = vector.load %arg4[%c0_5, %c0_6] : memref<128x128xbf16, #tpu.memory_space<vmem>>, vector<128x128xbf16>
    tpu.vector_store %arg4[%c0_5, %c0_6], %8 {strides = array<i32>} : memref<128x128xbf16, #tpu.memory_space<vmem>>, vector<128x128xbf16>,
    %10 = vector.extract_strided_slice %6 {offsets = [0, 128], sizes = [128, 128], strides = [1, 1]} : vector<128x384xf32> to vector<128x128xf32>
    %11 = arith.truncf %10 : vector<128x128xf32> to vector<128x128xbf16>
    %c0_7 = arith.constant 0 : index
    %c0_8 = arith.constant 0 : index
    %12 = vector.load %arg5[%c0_7, %c0_8] : memref<128x128xbf16, #tpu.memory_space<vmem>>, vector<128x128xbf16>
    tpu.vector_store %arg5[%c0_7, %c0_8], %11 {strides = array<i32>} : memref<128x128xbf16, #tpu.memory_space<vmem>>, vector<128x128xbf16>,
    %13 = vector.extract_strided_slice %6 {offsets = [0, 256], sizes = [128, 128], strides = [1, 1]} : vector<128x384xf32> to vector<128x128xf32>
    %14 = arith.truncf %13 : vector<128x128xf32> to vector<128x128xbf16>
    %c0_9 = arith.constant 0 : index
    %c0_10 = arith.constant 0 : index
    %15 = vector.load %arg6[%c0_9, %c0_10] : memref<128x128xbf16, #tpu.memory_space<vmem>>, vector<128x128xbf16>
    tpu.vector_store %arg6[%c0_9, %c0_10], %14 {strides = array<i32>} : memref<128x128xbf16, #tpu.memory_space<vmem>>, vector<128x128xbf16>,
    return
  }
  func.func @transform_0(%arg0: i32) -> (i32, i32) {
    %c0_i32 = arith.constant 0 : i32
    %c0_i32_0 = arith.constant 0 : i32
    return %arg0, %c0_i32 : i32, i32
  }
  func.func @transform_1(%arg0: i32) -> (i32, i32) {
    %c0_i32 = arith.constant 0 : i32
    %c0_i32_0 = arith.constant 0 : i32
    %c0_i32_1 = arith.constant 0 : i32
    return %c0_i32, %c0_i32_0 : i32, i32
  }
  func.func @transform_2(%arg0: i32) -> (i32, i32) {
    %c0_i32 = arith.constant 0 : i32
    %c0_i32_0 = arith.constant 0 : i32
    %c0_i32_1 = arith.constant 0 : i32
    return %c0_i32, %c0_i32_0 : i32, i32
  }
  func.func @transform_3(%arg0: i32) -> (i32, i32) {
    %c0_i32 = arith.constant 0 : i32
    %c0_i32_0 = arith.constant 0 : i32
    return %arg0, %c0_i32 : i32, i32
  }
  func.func @transform_4(%arg0: i32) -> (i32, i32) {
    %c0_i32 = arith.constant 0 : i32
    %c0_i32_0 = arith.constant 0 : i32
    return %arg0, %c0_i32 : i32, i32
  }
  func.func @transform_5(%arg0: i32) -> (i32, i32) {
    %c0_i32 = arith.constant 0 : i32
    %c0_i32_0 = arith.constant 0 : i32
    return %arg0, %c0_i32 : i32, i32
  }
}

module attributes {stable_mosaic.version = 11 : i64} {
  func.func @attention_kernel(%arg0: i32, %arg1: memref<128x128xbf16, #tpu.memory_space<vmem>>, %arg2: memref<256x128xbf16, #tpu.memory_space<vmem>>, %arg3: memref<256x128xbf16, #tpu.memory_space<vmem>>, %arg4: memref<128x128xf32, #tpu.memory_space<vmem>>, %arg5: memref<1x1xf32, #tpu.memory_space<smem>>, %arg6: memref<128x128xf32, #tpu.memory_space<vmem>>, %arg7: memref<128x256xf32, #tpu.memory_space<vmem>>) attributes {dimension_semantics = [#tpu.dimension_semantics<parallel>], iteration_bounds = array<i64: 2>, scalar_prefetch = 0 : i64, scratch_operands = 0 : i64, tpu.core_type = #tpu.core_type<tc>, window_params = [{transform_indices = @transform_0, window_bounds = array<i64: 128, 128>}, {pipeline_mode = #tpu.pipeline_mode<synchronous>, transform_indices = @transform_1, window_bounds = array<i64: 256, 128>}, {pipeline_mode = #tpu.pipeline_mode<synchronous>, transform_indices = @transform_2, window_bounds = array<i64: 256, 128>}, {transform_indices = @transform_3, window_bounds = array<i64: 128, 128>}, {transform_indices = @transform_4, window_bounds = array<i64: 1, 1>}, {transform_indices = @transform_5, window_bounds = array<i64: 128, 128>}, {transform_indices = @transform_6, window_bounds = array<i64: 128, 256>}]} {
    %c0 = arith.constant 0 : index
    %c0_0 = arith.constant 0 : index
    %0 = vector.load %arg1[%c0, %c0_0] : memref<128x128xbf16, #tpu.memory_space<vmem>>, vector<128x128xbf16>
    %c0_1 = arith.constant 0 : index
    %c0_2 = arith.constant 0 : index
    %1 = vector.load %arg2[%c0_1, %c0_2] : memref<256x128xbf16, #tpu.memory_space<vmem>>, vector<256x128xbf16>
    %c0_3 = arith.constant 0 : index
    %c0_4 = arith.constant 0 : index
    %2 = vector.load %arg3[%c0_3, %c0_4] : memref<256x128xbf16, #tpu.memory_space<vmem>>, vector<256x128xbf16>
    %cst = arith.constant dense<0.000000e+00> : vector<128x256xf32>
    %3 = tpu.matmul %0, %1, %cst {dimension_numbers = #tpu.dot_dimension_numbers<[1], [1], [0], [0], [0, 0, 1, 0], [], []>} : vector<128x128xbf16>, vector<256x128xbf16>, vector<128x256xf32> -> vector<128x256xf32>
    %cst_5 = arith.constant dense<0xFF800000> : vector<128xf32>
    %4 = vector.multi_reduction <maximumf>, %3, %cst_5 [1] : vector<128x256xf32> to vector<128xf32>
    %5 = vector.shape_cast %4 : vector<128xf32> to vector<128x1xf32>
    %6 = vector.broadcast %5 : vector<128x1xf32> to vector<128x256xf32>
    %7 = arith.subf %3, %6 : vector<128x256xf32>
    %8 = math.exp %7 : vector<128x256xf32>
    %cst_6 = arith.constant dense<0.000000e+00> : vector<128xf32>
    %9 = vector.multi_reduction <add>, %8, %cst_6 [1] : vector<128x256xf32> to vector<128xf32>
    %10 = vector.shape_cast %9 : vector<128xf32> to vector<128x1xf32>
    %11 = tpu.reciprocal %10 {approx = true} : vector<128x1xf32> -> vector<128x1xf32>
    %12 = vector.broadcast %11 : vector<128x1xf32> to vector<128x256xf32>
    %13 = arith.mulf %8, %12 : vector<128x256xf32>
    %c0_7 = arith.constant 0 : index
    %c0_8 = arith.constant 0 : index
    %14 = vector.load %arg7[%c0_7, %c0_8] : memref<128x256xf32, #tpu.memory_space<vmem>>, vector<128x256xf32>
    tpu.vector_store %arg7[%c0_7, %c0_8], %13 {strides = array<i32>} : memref<128x256xf32, #tpu.memory_space<vmem>>, vector<128x256xf32>,
    %15 = arith.truncf %13 : vector<128x256xf32> to vector<128x256xbf16>
    %cst_9 = arith.constant dense<0.000000e+00> : vector<128x128xf32>
    %16 = tpu.matmul %15, %2, %cst_9 {dimension_numbers = #tpu.dot_dimension_numbers<[1], [0], [0], [1], [0, 0, 1, 1], [], []>} : vector<128x256xbf16>, vector<256x128xbf16>, vector<128x128xf32> -> vector<128x128xf32>
    %c0_10 = arith.constant 0 : index
    %c0_11 = arith.constant 0 : index
    %17 = memref.load %arg5[%c0_10, %c0_11] : memref<1x1xf32, #tpu.memory_space<smem>>
    %18 = vector.broadcast %17 : f32 to vector<128x128xf32>
    %19 = arith.mulf %18, %16 : vector<128x128xf32>
    %c0_12 = arith.constant 0 : index
    %c0_13 = arith.constant 0 : index
    %20 = vector.load %arg4[%c0_12, %c0_13] : memref<128x128xf32, #tpu.memory_space<vmem>>, vector<128x128xf32>
    %21 = arith.addf %19, %20 : vector<128x128xf32>
    %c0_14 = arith.constant 0 : index
    %c0_15 = arith.constant 0 : index
    %22 = vector.load %arg6[%c0_14, %c0_15] : memref<128x128xf32, #tpu.memory_space<vmem>>, vector<128x128xf32>
    tpu.vector_store %arg6[%c0_14, %c0_15], %21 {strides = array<i32>} : memref<128x128xf32, #tpu.memory_space<vmem>>, vector<128x128xf32>,
    return
  }
  func.func @transform_0(%arg0: i32) -> (i32, i32) {
    %c0_i32 = arith.constant 0 : i32
    %c0_i32_0 = arith.constant 0 : i32
    return %arg0, %c0_i32 : i32, i32
  }
  func.func @transform_1(%arg0: i32) -> (i32, i32) {
    %c0_i32 = arith.constant 0 : i32
    %c0_i32_0 = arith.constant 0 : i32
    %c0_i32_1 = arith.constant 0 : i32
    return %c0_i32, %c0_i32_0 : i32, i32
  }
  func.func @transform_2(%arg0: i32) -> (i32, i32) {
    %c0_i32 = arith.constant 0 : i32
    %c0_i32_0 = arith.constant 0 : i32
    %c0_i32_1 = arith.constant 0 : i32
    return %c0_i32, %c0_i32_0 : i32, i32
  }
  func.func @transform_3(%arg0: i32) -> (i32, i32) {
    %c0_i32 = arith.constant 0 : i32
    %c0_i32_0 = arith.constant 0 : i32
    return %arg0, %c0_i32 : i32, i32
  }
  func.func @transform_4(%arg0: i32) -> (i32, i32) {
    %c0_i32 = arith.constant 0 : i32
    %c0_i32_0 = arith.constant 0 : i32
    %c0_i32_1 = arith.constant 0 : i32
    return %c0_i32, %c0_i32_0 : i32, i32
  }
  func.func @transform_5(%arg0: i32) -> (i32, i32) {
    %c0_i32 = arith.constant 0 : i32
    %c0_i32_0 = arith.constant 0 : i32
    return %arg0, %c0_i32 : i32, i32
  }
  func.func @transform_6(%arg0: i32) -> (i32, i32) {
    %c0_i32 = arith.constant 0 : i32
    %c0_i32_0 = arith.constant 0 : i32
    return %arg0, %c0_i32 : i32, i32
  }
}

</mosaic_0001>

<llo_original>
// kernel: self_attention.2
$region0: #{self_attention.2}
  #allocation0 [shape = 'u32[]', space=smem, size = 0x4, offset = 0x4, fixed_abs, tag = 'smem constant byte address 0x4 - core index']
  #allocation1 [shape = 'u32[144,128]{1,0:T(1,128)}', space=vmem, size = 0x12000, scoped, tag = 'internal scratch']
  %s0 = inlined_call_operand.vmem [shape: f32[256,128], index: 0, kind: input, shape index: {}]
  %s1 = inlined_call_operand.vmem [shape: bf16[128,384], index: 1, kind: input, shape index: {}]
  %s2 = inlined_call_operand.vmem [shape: f32[1,384], index: 2, kind: input, shape index: {}]
  %s3 = inlined_call_operand.vmem [shape: bf16[256,128], index: 3, kind: output, shape index: {0}]
  %s4 = inlined_call_operand.vmem [shape: bf16[256,128], index: 4, kind: output, shape index: {1}]
  %s5 = inlined_call_operand.vmem [shape: bf16[256,128], index: 5, kind: output, shape index: {2}]
  %6 = xla_tuple %s3, %s4, %s5
  %s7 = sld [smem:[#allocation0]]
  $region61: #{self_attention.2} parent=0
    _
  %s9 = ssub.s32 1, %s7
  %s10 = scalar_select 0, %s9, %s7
  loop: start=0, step=1, limit=4
  $region2: #{self_attention.2} parent=0 // loop_pre_header
    _
  $region3: #{self_attention.2} parent=0 // loop_header
    %s12 = sphi 0, %s16
    %p13 = scmp.ge.s32.totalorder %s12, 4
    %s22 = sphi 0, %s24
    %s25 = sphi 0, %s22
    %s26 = sphi 0, %s25
    %s42 = sphi 0, %s26
    %s46 = sphi 0, %s46
    %s48 = sphi 0, %s46
    %s49 = sphi 0, %s48
    %s63 = sphi 0, %s49
    %s67 = sphi 0, %s67
    %s69 = sphi 0, %s67
    %s70 = sphi 0, %s69
    %s84 = sphi 0, %s70
    %s90 = sphi 0, %s92
    %s93 = sphi 0, %s90
    %s94 = sphi 0, %s93
    %s110 = sphi 0, %s94
    %s116 = sphi 0, %s118
    %s119 = sphi 0, %s116
    %s120 = sphi 0, %s119
    %s136 = sphi 0, %s120
    %s142 = sphi 0, %s144
    %s145 = sphi 0, %s142
    %s146 = sphi 0, %s145
    %s162 = sphi 0, %s146
  $region4: #{self_attention.2} parent=0 // loop_header_branch
    %15 = sbr.rel (%p13) target = $region8
  $region5: #{self_attention.2} parent=0 // loop_body
    %s17 = ssub.s32 %s12, 1
    %s18 = ssub.s32 %s12, 2
    %s19 = sadd.s32 %s12, 1
    %s20 = ssub.s32 %s12, %s19
    %p21 = scmp.eq.s32.totalorder %s20, 0
    %s23 = sadd.s32 %s22, 1
    %s24 = scalar_select %p21, %s22, %s23
    %p27 = pneg %p21
    %p28 = scmp.eq.s32.totalorder %s12, 1
    %p29 = por %p27, %p28
    %p30 = scmp.ne.s32.totalorder %s22, %s25
    %p31 = scmp.eq.s32.totalorder %s12, 0
    %p32 = por %p30, %p31
    %p33 = scmp.ne.s32.totalorder %s22, %s25
    %p34 = scmp.eq.s32.totalorder %s17, 1
    %p35 = por %p33, %p34
    %p36 = scmp.ne.s32.totalorder %s25, %s26
    %p37 = scmp.eq.s32.totalorder %s17, 0
    %p38 = por %p36, %p37
    %p39 = scmp.ne.s32.totalorder %s25, %s26
    %p40 = scmp.eq.s32.totalorder %s18, 1
    %p41 = por %p39, %p40
    %p43 = scmp.ne.s32.totalorder %s26, %s42
    %p44 = scmp.eq.s32.totalorder %s18, 0
    %p45 = por %p43, %p44
    %s47 = sadd.s32 %s46, 1
    %p50 = scmp.eq.s32.totalorder %s12, 1
    %p51 = scmp.ne.s32.totalorder %s46, %s48
    %p52 = scmp.eq.s32.totalorder %s12, 0
    %p53 = por %p51, %p52
    %p54 = scmp.ne.s32.totalorder %s46, %s48
    %p55 = scmp.eq.s32.totalorder %s17, 1
    %p56 = por %p54, %p55
    %p57 = scmp.ne.s32.totalorder %s48, %s49
    %p58 = scmp.eq.s32.totalorder %s17, 0
    %p59 = por %p57, %p58
    %p60 = scmp.ne.s32.totalorder %s48, %s49
    %p61 = scmp.eq.s32.totalorder %s18, 1
    %p62 = por %p60, %p61
    %p64 = scmp.ne.s32.totalorder %s49, %s63
    %p65 = scmp.eq.s32.totalorder %s18, 0
    %p66 = por %p64, %p65
    %s68 = sadd.s32 %s67, 1
    %p71 = scmp.eq.s32.totalorder %s12, 1
    %p72 = scmp.ne.s32.totalorder %s67, %s69
    %p73 = scmp.eq.s32.totalorder %s12, 0
    %p74 = por %p72, %p73
    %p75 = scmp.ne.s32.totalorder %s67, %s69
    %p76 = scmp.eq.s32.totalorder %s17, 1
    %p77 = por %p75, %p76
    %p78 = scmp.ne.s32.totalorder %s69, %s70
    %p79 = scmp.eq.s32.totalorder %s17, 0
    %p80 = por %p78, %p79
    %p81 = scmp.ne.s32.totalorder %s69, %s70
    %p82 = scmp.eq.s32.totalorder %s18, 1
    %p83 = por %p81, %p82
    %p85 = scmp.ne.s32.totalorder %s70, %s84
    %p86 = scmp.eq.s32.totalorder %s18, 0
    %p87 = por %p85, %p86
    %s88 = ssub.s32 %s12, %s19
    %p89 = scmp.eq.s32.totalorder %s88, 0
    %s91 = sadd.s32 %s90, 1
    %s92 = scalar_select %p89, %s90, %s91
    %p95 = pneg %p89
    %p96 = scmp.eq.s32.totalorder %s12, 1
    %p97 = por %p95, %p96
    %p98 = scmp.ne.s32.totalorder %s90, %s93
    %p99 = scmp.eq.s32.totalorder %s12, 0
    %p100 = por %p98, %p99
    %p101 = scmp.ne.s32.totalorder %s90, %s93
    %p102 = scmp.eq.s32.totalorder %s17, 1
    %p103 = por %p101, %p102
    %p104 = scmp.ne.s32.totalorder %s93, %s94
    %p105 = scmp.eq.s32.totalorder %s17, 0
    %p106 = por %p104, %p105
    %p107 = scmp.ne.s32.totalorder %s93, %s94
    %p108 = scmp.eq.s32.totalorder %s18, 1
    %p109 = por %p107, %p108
    %p111 = scmp.ne.s32.totalorder %s94, %s110
    %p112 = scmp.eq.s32.totalorder %s18, 0
    %p113 = por %p111, %p112
    %s114 = ssub.s32 %s12, %s19
    %p115 = scmp.eq.s32.totalorder %s114, 0
    %s117 = sadd.s32 %s116, 1
    %s118 = scalar_select %p115, %s116, %s117
    %p121 = pneg %p115
    %p122 = scmp.eq.s32.totalorder %s12, 1
    %p123 = por %p121, %p122
    %p124 = scmp.ne.s32.totalorder %s116, %s119
    %p125 = scmp.eq.s32.totalorder %s12, 0
    %p126 = por %p124, %p125
    %p127 = scmp.ne.s32.totalorder %s116, %s119
    %p128 = scmp.eq.s32.totalorder %s17, 1
    %p129 = por %p127, %p128
    %p130 = scmp.ne.s32.totalorder %s119, %s120
    %p131 = scmp.eq.s32.totalorder %s17, 0
    %p132 = por %p130, %p131
    %p133 = scmp.ne.s32.totalorder %s119, %s120
    %p134 = scmp.eq.s32.totalorder %s18, 1
    %p135 = por %p133, %p134
    %p137 = scmp.ne.s32.totalorder %s120, %s136
    %p138 = scmp.eq.s32.totalorder %s18, 0
    %p139 = por %p137, %p138
    %s140 = ssub.s32 %s12, %s19
    %p141 = scmp.eq.s32.totalorder %s140, 0
    %s143 = sadd.s32 %s142, 1
    %s144 = scalar_select %p141, %s142, %s143
    %p147 = pneg %p141
    %p148 = scmp.eq.s32.totalorder %s12, 1
    %p149 = por %p147, %p148
    %p150 = scmp.ne.s32.totalorder %s142, %s145
    %p151 = scmp.eq.s32.totalorder %s12, 0
    %p152 = por %p150, %p151
    %p153 = scmp.ne.s32.totalorder %s142, %s145
    %p154 = scmp.eq.s32.totalorder %s17, 1
    %p155 = por %p153, %p154
    %p156 = scmp.ne.s32.totalorder %s145, %s146
    %p157 = scmp.eq.s32.totalorder %s17, 0
    %p158 = por %p156, %p157
    %p159 = scmp.ne.s32.totalorder %s145, %s146
    %p160 = scmp.eq.s32.totalorder %s18, 1
    %p161 = por %p159, %p160
    %p163 = scmp.ne.s32.totalorder %s146, %s162
    %p164 = scmp.eq.s32.totalorder %s18, 0
    %p165 = por %p163, %p164
    %p166 = scmp.le.s32.totalorder 1, %s12
    %p167 = scmp.lt.s32.totalorder %s12, 3
    %p168 = pnand %p166, %p167
    %p169 = pneg %p168
    // Predicated region
    $region9: #{self_attention.2} parent=5 // pred_check
      _
    $region10: #{self_attention.2} parent=5 // pred_check_branch
      %171 = sbr.rel (%p168) target = $region12
    $region11: #{self_attention.2} parent=5 // pred_region
      %s172 = ssub.s32 %s12, 1
      // Predicated region
      $region13: #{self_attention.2} parent=11 // pred_check
        %p173 = pneg %p59
      $region14: #{self_attention.2} parent=11 // pred_check_branch
        %175 = sbr.rel (%p173) target = $region16
      $region15: #{self_attention.2} parent=11 // pred_region
        _
      $region16: #{self_attention.2} parent=11 // pred_fallthru
        _
      // Predicated region
      $region17: #{self_attention.2} parent=11 // pred_check
        %p176 = pneg %p80
      $region18: #{self_attention.2} parent=11 // pred_check_branch
        %178 = sbr.rel (%p176) target = $region20
      $region19: #{self_attention.2} parent=11 // pred_region
        _
      $region20: #{self_attention.2} parent=11 // pred_fallthru
        _
    $region12: #{self_attention.2} parent=5 // pred_fallthru
      _
    %p179 = scmp.lt.s32.totalorder %s12, 2
    // Predicated region
    $region21: #{self_attention.2} parent=5 // pred_check
      %p180 = pneg %p179
    $region22: #{self_attention.2} parent=5 // pred_check_branch
      %182 = sbr.rel (%p180) target = $region24
    $region23: #{self_attention.2} parent=5 // pred_region
      // Predicated region
      $region25: #{self_attention.2} parent=23 // pred_check
        %p183 = pneg %p32
      $region26: #{self_attention.2} parent=23 // pred_check_branch
        %185 = sbr.rel (%p183) target = $region28
      $region27: #{self_attention.2} parent=23 // pred_region
        %s186 = smul.u32 16, %s12
        %p187 = scmp.lt.s32.totalorder %s186, 31
        %s188 = scalar_select %p187, %s186, 31
        %s189 = smul.addr %s188, 8
        %s190 = scalar_lea.vmem %s0, %s189
        %s191 = smul.u32 16, %s12
      $region28: #{self_attention.2} parent=23 // pred_fallthru
        _
    $region24: #{self_attention.2} parent=5 // pred_fallthru
      _
    %p192 = scmp.le.s32.totalorder 1, %s12
    %p193 = scmp.lt.s32.totalorder %s12, 3
    %p194 = pnand %p192, %p193
    %p195 = pneg %p194
    // Predicated region
    $region29: #{self_attention.2} parent=5 // pred_check
      _
    $region30: #{self_attention.2} parent=5 // pred_check_branch
      %197 = sbr.rel (%p194) target = $region32
    $region31: #{self_attention.2} parent=5 // pred_region
      %s198 = ssub.s32 %s12, 1
      %s199 = smul.u32 16, %s17
      %p200 = scmp.lt.s32.totalorder %s199, 31
      %s201 = scalar_select %p200, %s199, 31
      %s202 = smul.addr %s201, 8
      %s203 = scalar_lea.vmem %s0, %s202
      %p204 = pneg %p38
      %p205 = pneg %p35
      %p206 = pneg %p59
      %p207 = pneg %p56
      %p208 = pneg %p80
      %p209 = pneg %p77
      %p210 = pneg %p106
      %p211 = pneg %p103
      %s212 = smul.u32 16, %s17
      %p213 = scmp.lt.s32.totalorder %s212, 31
      %s214 = scalar_select %p213, %s212, 31
      %s215 = smul.addr %s214, 4
      %s216 = scalar_lea.vmem %s3, %s215
      %p217 = pneg %p132
      %p218 = pneg %p129
      %s219 = smul.u32 16, %s17
      %p220 = scmp.lt.s32.totalorder %s219, 31
      %s221 = scalar_select %p220, %s219, 31
      %s222 = smul.addr %s221, 4
      %s223 = scalar_lea.vmem %s4, %s222
      %p224 = pneg %p158
      %p225 = pneg %p155
      %s226 = smul.u32 16, %s17
      %p227 = scmp.lt.s32.totalorder %s226, 31
      %s228 = scalar_select %p227, %s226, 31
      %s229 = smul.addr %s228, 4
      %s230 = scalar_lea.vmem %s5, %s229
      %s231 = smul.u32 16, %s17
      %p232 = scmp.lt.s32.totalorder %s231, 31
      %s233 = scalar_select %p232, %s231, 31
      %s234 = smul.addr %s233, 8
      %s235 = scalar_lea.vmem %s0, %s234
      %s236 = smul.u32 16, %s17
      %s237 = smul.u32 16, %s17
      %p238 = scmp.lt.s32.totalorder %s237, 31
      %s239 = scalar_select %p238, %s237, 31
      %s240 = smul.addr %s239, 4
      %s241 = scalar_lea.vmem %s3, %s240
      %s242 = smul.u32 16, %s17
      %s243 = smul.u32 16, %s17
      %p244 = scmp.lt.s32.totalorder %s243, 31
      %s245 = scalar_select %p244, %s243, 31
      %s246 = smul.addr %s245, 4
      %s247 = scalar_lea.vmem %s4, %s246
      %s248 = smul.u32 16, %s17
      %s249 = smul.u32 16, %s17
      %p250 = scmp.lt.s32.totalorder %s249, 31
      %s251 = scalar_select %p250, %s249, 31
      %s252 = smul.addr %s251, 4
      %s253 = scalar_lea.vmem %s5, %s252
      %s254 = smul.u32 16, %s17
      %v256 = vld [vmem:[%s235] sm:$0xff]
      %v257 = vld [vmem:[%s235 + $0x8] sm:$0xff]
      %v258 = vld [vmem:[%s235 + $0x10] sm:$0xff]
      %v259 = vld [vmem:[%s235 + $0x18] sm:$0xff]
      %v260 = vld [vmem:[%s235 + $0x20] sm:$0xff]
      %v261 = vld [vmem:[%s235 + $0x28] sm:$0xff]
      %v262 = vld [vmem:[%s235 + $0x30] sm:$0xff]
      %v263 = vld [vmem:[%s235 + $0x38] sm:$0xff]
      %v264 = vld [vmem:[%s235 + $0x40] sm:$0xff]
      %v265 = vld [vmem:[%s235 + $0x48] sm:$0xff]
      %v266 = vld [vmem:[%s235 + $0x50] sm:$0xff]
      %v267 = vld [vmem:[%s235 + $0x58] sm:$0xff]
      %v268 = vld [vmem:[%s235 + $0x60] sm:$0xff]
      %v269 = vld [vmem:[%s235 + $0x68] sm:$0xff]
      %v270 = vld [vmem:[%s235 + $0x70] sm:$0xff]
      %v271 = vld [vmem:[%s235 + $0x78] sm:$0xff]
      %v272 = vpack.c.bf16 %v257, %v256
      %v273 = vpack.c.bf16 %v259, %v258
      %v274 = vpack.c.bf16 %v261, %v260
      %v275 = vpack.c.bf16 %v263, %v262
      %v276 = vpack.c.bf16 %v265, %v264
      %v277 = vpack.c.bf16 %v267, %v266
      %v278 = vpack.c.bf16 %v269, %v268
      %v279 = vpack.c.bf16 %v271, %v270
      %v280 = vld [vmem:[%s1] sm:$0xff]
      %v281 = vld [vmem:[%s1 + $0x8] sm:$0xf]
      %v282 = vld [vmem:[%s1 + $0xc] sm:$0xff]
      %v283 = vld [vmem:[%s1 + $0x14] sm:$0xf]
      %v284 = vld [vmem:[%s1 + $0x18] sm:$0xff]
      %v285 = vld [vmem:[%s1 + $0x20] sm:$0xf]
      %v286 = vld [vmem:[%s1 + $0x24] sm:$0xff]
      %v287 = vld [vmem:[%s1 + $0x2c] sm:$0xf]
      %v288 = vld [vmem:[%s1 + $0x30] sm:$0xff]
      %v289 = vld [vmem:[%s1 + $0x38] sm:$0xf]
      %v290 = vld [vmem:[%s1 + $0x3c] sm:$0xff]
      %v291 = vld [vmem:[%s1 + $0x44] sm:$0xf]
      %v292 = vld [vmem:[%s1 + $0x48] sm:$0xff]
      %v293 = vld [vmem:[%s1 + $0x50] sm:$0xf]
      %v294 = vld [vmem:[%s1 + $0x54] sm:$0xff]
      %v295 = vld [vmem:[%s1 + $0x5c] sm:$0xf]
      %v296 = vld [vmem:[%s1 + $0x60] sm:$0xff]
      %v297 = vld [vmem:[%s1 + $0x68] sm:$0xf]
      %v298 = vld [vmem:[%s1 + $0x6c] sm:$0xff]
      %v299 = vld [vmem:[%s1 + $0x74] sm:$0xf]
      %v300 = vld [vmem:[%s1 + $0x78] sm:$0xff]
      %v301 = vld [vmem:[%s1 + $0x80] sm:$0xf]
      %v302 = vld [vmem:[%s1 + $0x84] sm:$0xff]
      %v303 = vld [vmem:[%s1 + $0x8c] sm:$0xf]
      %v304 = vld [vmem:[%s1 + $0x90] sm:$0xff]
      %v305 = vld [vmem:[%s1 + $0x98] sm:$0xf]
      %v306 = vld [vmem:[%s1 + $0x9c] sm:$0xff]
      %v307 = vld [vmem:[%s1 + $0xa4] sm:$0xf]
      %v308 = vld [vmem:[%s1 + $0xa8] sm:$0xff]
      %v309 = vld [vmem:[%s1 + $0xb0] sm:$0xf]
      %v310 = vld [vmem:[%s1 + $0xb4] sm:$0xff]
      %v311 = vld [vmem:[%s1 + $0xbc] sm:$0xf]
      %v312 = vld [vmem:[%s2] sm:$0x7]
      %v314 = vlaneseq
      %v315 = vshrl.u32 %v314, 7
      %v316 = vsub.s32 0, %v315
      %v317 = vrot.slane %v312, %v316
      %v318 = vlaneseq
      %v319 = vshrl.u32 %v318, 7
      %v320 = vsub.s32 1, %v319
      %v321 = vrot.slane %v312, %v320
      %v322 = vlaneseq
      %v323 = vshrl.u32 %v322, 7
      %v324 = vsub.s32 2, %v323
      %v325 = vrot.slane %v312, %v324
      %v361 = vunpack.c.l.b16 %v280
      %v362 = vunpack.c.h.b16 %v280
      %v363 = vunpack.c.l.b16 %v281
      %v364 = vunpack.c.l.b16 %v282
      %v365 = vunpack.c.h.b16 %v282
      %v366 = vunpack.c.l.b16 %v283
      %v367 = vunpack.c.l.b16 %v284
      %v368 = vunpack.c.h.b16 %v284
      %v369 = vunpack.c.l.b16 %v285
      %v370 = vunpack.c.l.b16 %v286
      %v371 = vunpack.c.h.b16 %v286
      %v372 = vunpack.c.l.b16 %v287
      %v373 = vunpack.c.l.b16 %v288
      %v374 = vunpack.c.h.b16 %v288
      %v375 = vunpack.c.l.b16 %v289
      %v376 = vunpack.c.l.b16 %v290
      %v377 = vunpack.c.h.b16 %v290
      %v378 = vunpack.c.l.b16 %v291
      %v379 = vunpack.c.l.b16 %v292
      %v380 = vunpack.c.h.b16 %v292
      %v381 = vunpack.c.l.b16 %v293
      %v382 = vunpack.c.l.b16 %v294
      %v383 = vunpack.c.h.b16 %v294
      %v384 = vunpack.c.l.b16 %v295
      %v385 = vunpack.c.l.b16 %v296
      %v386 = vunpack.c.h.b16 %v296
      %v387 = vunpack.c.l.b16 %v297
      %v388 = vunpack.c.l.b16 %v298
      %v389 = vunpack.c.h.b16 %v298
      %v390 = vunpack.c.l.b16 %v299
      %v391 = vunpack.c.l.b16 %v300
      %v392 = vunpack.c.h.b16 %v300
      %v393 = vunpack.c.l.b16 %v301
      %v394 = vunpack.c.l.b16 %v302
      %v395 = vunpack.c.h.b16 %v302
      %v396 = vunpack.c.l.b16 %v303
      %v397 = vunpack.c.l.b16 %v304
      %v398 = vunpack.c.h.b16 %v304
      %v399 = vunpack.c.l.b16 %v305
      %v400 = vunpack.c.l.b16 %v306
      %v401 = vunpack.c.h.b16 %v306
      %v402 = vunpack.c.l.b16 %v307
      %v403 = vunpack.c.l.b16 %v308
      %v404 = vunpack.c.h.b16 %v308
      %v405 = vunpack.c.l.b16 %v309
      %v406 = vunpack.c.l.b16 %v310
      %v407 = vunpack.c.h.b16 %v310
      %v408 = vunpack.c.l.b16 %v311
      %v409 = vpack.c.b16 %v364, %v361
      %v410 = vpack.c.b16 %v365, %v362
      %v411 = vpack.c.b16 %v366, %v363
      %v412 = vpack.c.b16 %v370, %v367
      %v413 = vpack.c.b16 %v371, %v368
      %v414 = vpack.c.b16 %v372, %v369
      %v415 = vpack.c.b16 %v376, %v373
      %v416 = vpack.c.b16 %v377, %v374
      %v417 = vpack.c.b16 %v378, %v375
      %v418 = vpack.c.b16 %v382, %v379
      %v419 = vpack.c.b16 %v383, %v380
      %v420 = vpack.c.b16 %v384, %v381
      %v421 = vpack.c.b16 %v388, %v385
      %v422 = vpack.c.b16 %v389, %v386
      %v423 = vpack.c.b16 %v390, %v387
      %v424 = vpack.c.b16 %v394, %v391
      %v425 = vpack.c.b16 %v395, %v392
      %v426 = vpack.c.b16 %v396, %v393
      %v427 = vpack.c.b16 %v400, %v397
      %v428 = vpack.c.b16 %v401, %v398
      %v429 = vpack.c.b16 %v402, %v399
      %v430 = vpack.c.b16 %v406, %v403
      %v431 = vpack.c.b16 %v407, %v404
      %v432 = vpack.c.b16 %v408, %v405
      %457 = vmatprep.subr.bf16.mxu0 %v410
      %458 = vmatpush1.bf16.msra.mxu0 %v409
      %459 = vmatprep.subr.bf16.mxu0 %v413
      %460 = vmatpush1.bf16.msra.mxu0 %v412
      %461 = vmatprep.subr.bf16.mxu0 %v416
      %462 = vmatpush1.bf16.msra.mxu0 %v415
      %463 = vmatprep.subr.bf16.mxu0 %v419
      %464 = vmatpush1.bf16.msra.mxu0 %v418
      %465 = vmatprep.subr.bf16.mxu0 %v422
      %466 = vmatpush1.bf16.msra.mxu0 %v421
      %467 = vmatprep.subr.bf16.mxu0 %v425
      %468 = vmatpush1.bf16.msra.mxu0 %v424
      %469 = vmatprep.subr.bf16.mxu0 %v428
      %470 = vmatpush1.bf16.msra.mxu0 %v427
      %471 = vmatprep.subr.bf16.mxu0 %v431
      %472 = vmatpush1.bf16.msra.mxu0 %v430
      %473 = vmatprep.subr.bf16.mxu0 0
      %474 = vmatpush1.bf16.msra.mxu0 0
      %475 = vmatprep.subr.bf16.mxu0 0
      %476 = vmatpush1.bf16.msra.mxu0 0
      %477 = vmatprep.subr.bf16.mxu0 0
      %478 = vmatpush1.bf16.msra.mxu0 0
      %479 = vmatprep.subr.bf16.mxu0 0
      %480 = vmatpush1.bf16.msra.mxu0 0
      %481 = vmatprep.subr.bf16.mxu0 0
      %482 = vmatpush1.bf16.msra.mxu0 0
      %483 = vmatprep.subr.bf16.mxu0 0
      %484 = vmatpush1.bf16.msra.mxu0 0
      %485 = vmatprep.subr.bf16.mxu0 0
      %486 = vmatpush1.bf16.msra.mxu0 0
      %487 = vmatprep.subr.bf16.mxu0 0
      %488 = vmatpush1.bf16.msra.mxu0 0
      %489 = vmatprep.mubr.bf16.mxu0 0
      %490 = vmatmul.mubr.bf16.gmra.mrb[0].mxu0 %v272
      %v491 = vpop.f32.mrb[0].mxu0
      %v492 = vadd.f32 %v317, %v491
      %v493 = vpop.f32.mrb[0].mxu0
      %v494 = vadd.f32 %v321, %v493
      %v495 = vpop.f32.mrb[0].mxu0
      %v496 = vadd.f32 %v317, %v495
      %v497 = vpop.f32.mrb[0].mxu0
      %v498 = vadd.f32 %v321, %v497
      %499 = vmatprep.mubr.bf16.mxu0 0
      %500 = vmatmul.mubr.bf16.gmra.mrb[0].mxu0 %v273
      %v501 = vpop.f32.mrb[0].mxu0
      %v502 = vadd.f32 %v317, %v501
      %v503 = vpop.f32.mrb[0].mxu0
      %v504 = vadd.f32 %v321, %v503
      %v505 = vpop.f32.mrb[0].mxu0
      %v506 = vadd.f32 %v317, %v505
      %v507 = vpop.f32.mrb[0].mxu0
      %v508 = vadd.f32 %v321, %v507
      %509 = vmatprep.mubr.bf16.mxu0 0
      %510 = vmatmul.mubr.bf16.gmra.mrb[0].mxu0 %v274
      %v511 = vpop.f32.mrb[0].mxu0
      %v512 = vadd.f32 %v317, %v511
      %v513 = vpop.f32.mrb[0].mxu0
      %v514 = vadd.f32 %v321, %v513
      %v515 = vpop.f32.mrb[0].mxu0
      %v516 = vadd.f32 %v317, %v515
      %v517 = vpop.f32.mrb[0].mxu0
      %v518 = vadd.f32 %v321, %v517
      %519 = vmatprep.mubr.bf16.mxu0 0
      %520 = vmatmul.mubr.bf16.gmra.mrb[0].mxu0 %v275
      %v521 = vpop.f32.mrb[0].mxu0
      %v522 = vadd.f32 %v317, %v521
      %v523 = vpop.f32.mrb[0].mxu0
      %v524 = vadd.f32 %v321, %v523
      %v525 = vpop.f32.mrb[0].mxu0
      %v526 = vadd.f32 %v317, %v525
      %v527 = vpop.f32.mrb[0].mxu0
      %v528 = vadd.f32 %v321, %v527
      %529 = vmatprep.mubr.bf16.mxu0 0
      %530 = vmatmul.mubr.bf16.gmra.mrb[0].mxu0 %v276
      %v531 = vpop.f32.mrb[0].mxu0
      %v532 = vadd.f32 %v317, %v531
      %v533 = vpop.f32.mrb[0].mxu0
      %v534 = vadd.f32 %v321, %v533
      %v535 = vpop.f32.mrb[0].mxu0
      %v536 = vadd.f32 %v317, %v535
      %v537 = vpop.f32.mrb[0].mxu0
      %v538 = vadd.f32 %v321, %v537
      %539 = vmatprep.mubr.bf16.mxu0 0
      %540 = vmatmul.mubr.bf16.gmra.mrb[0].mxu0 %v277
      %v541 = vpop.f32.mrb[0].mxu0
      %v542 = vadd.f32 %v317, %v541
      %v543 = vpop.f32.mrb[0].mxu0
      %v544 = vadd.f32 %v321, %v543
      %v545 = vpop.f32.mrb[0].mxu0
      %v546 = vadd.f32 %v317, %v545
      %v547 = vpop.f32.mrb[0].mxu0
      %v548 = vadd.f32 %v321, %v547
      %549 = vmatprep.mubr.bf16.mxu0 0
      %550 = vmatmul.mubr.bf16.gmra.mrb[0].mxu0 %v278
      %v551 = vpop.f32.mrb[0].mxu0
      %v552 = vadd.f32 %v317, %v551
      %v553 = vpop.f32.mrb[0].mxu0
      %v554 = vadd.f32 %v321, %v553
      %v555 = vpop.f32.mrb[0].mxu0
      %v556 = vadd.f32 %v317, %v555
      %v557 = vpop.f32.mrb[0].mxu0
      %v558 = vadd.f32 %v321, %v557
      %559 = vmatprep.mubr.bf16.mxu0 0
      %560 = vmatmul.mubr.bf16.gmra.mrb[0].mxu0 %v279
      %v561 = vpop.f32.mrb[0].mxu0
      %v562 = vadd.f32 %v317, %v561
      %v563 = vpop.f32.mrb[0].mxu0
      %v564 = vadd.f32 %v321, %v563
      %v565 = vpop.f32.mrb[0].mxu0
      %v566 = vadd.f32 %v317, %v565
      %v567 = vpop.f32.mrb[0].mxu0
      %v568 = vadd.f32 %v321, %v567
      %569 = vdwg.mxu0
      %570 = vmatprep.subr.bf16.mxu0 0
      %571 = vmatpush1.bf16.msra.mxu0 %v411
      %572 = vmatprep.subr.bf16.mxu0 0
      %573 = vmatpush1.bf16.msra.mxu0 %v414
      %574 = vmatprep.subr.bf16.mxu0 0
      %575 = vmatpush1.bf16.msra.mxu0 %v417
      %576 = vmatprep.subr.bf16.mxu0 0
      %577 = vmatpush1.bf16.msra.mxu0 %v420
      %578 = vmatprep.subr.bf16.mxu0 0
      %579 = vmatpush1.bf16.msra.mxu0 %v423
      %580 = vmatprep.subr.bf16.mxu0 0
      %581 = vmatpush1.bf16.msra.mxu0 %v426
      %582 = vmatprep.subr.bf16.mxu0 0
      %583 = vmatpush1.bf16.msra.mxu0 %v429
      %584 = vmatprep.subr.bf16.mxu0 0
      %585 = vmatpush1.bf16.msra.mxu0 %v432
      %586 = vmatprep.subr.bf16.mxu0 0
      %587 = vmatpush1.bf16.msra.mxu0 0
      %588 = vmatprep.subr.bf16.mxu0 0
      %589 = vmatpush1.bf16.msra.mxu0 0
      %590 = vmatprep.subr.bf16.mxu0 0
      %591 = vmatpush1.bf16.msra.mxu0 0
      %592 = vmatprep.subr.bf16.mxu0 0
      %593 = vmatpush1.bf16.msra.mxu0 0
      %594 = vmatprep.subr.bf16.mxu0 0
      %595 = vmatpush1.bf16.msra.mxu0 0
      %596 = vmatprep.subr.bf16.mxu0 0
      %597 = vmatpush1.bf16.msra.mxu0 0
      %598 = vmatprep.subr.bf16.mxu0 0
      %599 = vmatpush1.bf16.msra.mxu0 0
      %600 = vmatprep.subr.bf16.mxu0 0
      %601 = vmatpush1.bf16.msra.mxu0 0
      %602 = vmatprep.mubr.bf16.mxu0 0
      %603 = vmatmul.mubr.bf16.gmra.mrb[0].mxu0 %v272
      %v604 = vpop.f32.mrb[0].mxu0
      %v605 = vadd.f32 %v325, %v604
      %v606 = vpop.f32.mrb[0].mxu0
      %v607 = vpop.f32.mrb[0].mxu0
      %v608 = vadd.f32 %v325, %v607
      %v609 = vpop.f32.mrb[0].mxu0
      %610 = vmatprep.mubr.bf16.mxu0 0
      %611 = vmatmul.mubr.bf16.gmra.mrb[0].mxu0 %v273
      %v612 = vpop.f32.mrb[0].mxu0
      %v613 = vadd.f32 %v325, %v612
      %v614 = vpop.f32.mrb[0].mxu0
      %v615 = vpop.f32.mrb[0].mxu0
      %v616 = vadd.f32 %v325, %v615
      %v617 = vpop.f32.mrb[0].mxu0
      %618 = vmatprep.mubr.bf16.mxu0 0
      %619 = vmatmul.mubr.bf16.gmra.mrb[0].mxu0 %v274
      %v620 = vpop.f32.mrb[0].mxu0
      %v621 = vadd.f32 %v325, %v620
      %v622 = vpop.f32.mrb[0].mxu0
      %v623 = vpop.f32.mrb[0].mxu0
      %v624 = vadd.f32 %v325, %v623
      %v625 = vpop.f32.mrb[0].mxu0
      %626 = vmatprep.mubr.bf16.mxu0 0
      %627 = vmatmul.mubr.bf16.gmra.mrb[0].mxu0 %v275
      %v628 = vpop.f32.mrb[0].mxu0
      %v629 = vadd.f32 %v325, %v628
      %v630 = vpop.f32.mrb[0].mxu0
      %v631 = vpop.f32.mrb[0].mxu0
      %v632 = vadd.f32 %v325, %v631
      %v633 = vpop.f32.mrb[0].mxu0
      %634 = vmatprep.mubr.bf16.mxu0 0
      %635 = vmatmul.mubr.bf16.gmra.mrb[0].mxu0 %v276
      %v636 = vpop.f32.mrb[0].mxu0
      %v637 = vadd.f32 %v325, %v636
      %v638 = vpop.f32.mrb[0].mxu0
      %v639 = vpop.f32.mrb[0].mxu0
      %v640 = vadd.f32 %v325, %v639
      %v641 = vpop.f32.mrb[0].mxu0
      %642 = vmatprep.mubr.bf16.mxu0 0
      %643 = vmatmul.mubr.bf16.gmra.mrb[0].mxu0 %v277
      %v644 = vpop.f32.mrb[0].mxu0
      %v645 = vadd.f32 %v325, %v644
      %v646 = vpop.f32.mrb[0].mxu0
      %v647 = vpop.f32.mrb[0].mxu0
      %v648 = vadd.f32 %v325, %v647
      %v649 = vpop.f32.mrb[0].mxu0
      %650 = vmatprep.mubr.bf16.mxu0 0
      %651 = vmatmul.mubr.bf16.gmra.mrb[0].mxu0 %v278
      %v652 = vpop.f32.mrb[0].mxu0
      %v653 = vadd.f32 %v325, %v652
      %v654 = vpop.f32.mrb[0].mxu0
      %v655 = vpop.f32.mrb[0].mxu0
      %v656 = vadd.f32 %v325, %v655
      %v657 = vpop.f32.mrb[0].mxu0
      %658 = vmatprep.mubr.bf16.mxu0 0
      %659 = vmatmul.mubr.bf16.gmra.mrb[0].mxu0 %v279
      %v660 = vpop.f32.mrb[0].mxu0
      %v661 = vadd.f32 %v325, %v660
      %v662 = vpop.f32.mrb[0].mxu0
      %v663 = vpop.f32.mrb[0].mxu0
      %v664 = vadd.f32 %v325, %v663
      %v665 = vpop.f32.mrb[0].mxu0
      %666 = vdwg.mxu0
      %v667 = vpack.c.bf16 %v496, %v492
      %v668 = vpack.c.bf16 %v506, %v502
      %v669 = vpack.c.bf16 %v516, %v512
      %v670 = vpack.c.bf16 %v526, %v522
      %v671 = vpack.c.bf16 %v536, %v532
      %v672 = vpack.c.bf16 %v546, %v542
      %v673 = vpack.c.bf16 %v556, %v552
      %v674 = vpack.c.bf16 %v566, %v562
      %v683 = vunpack.c.l.b16 %v667
      %v684 = vunpack.c.h.b16 %v667
      %v685 = vunpack.c.l.b16 %v668
      %v686 = vunpack.c.h.b16 %v668
      %v687 = vunpack.c.l.b16 %v669
      %v688 = vunpack.c.h.b16 %v669
      %v689 = vunpack.c.l.b16 %v670
      %v690 = vunpack.c.h.b16 %v670
      %v691 = vunpack.c.l.b16 %v671
      %v692 = vunpack.c.h.b16 %v671
      %v693 = vunpack.c.l.b16 %v672
      %v694 = vunpack.c.h.b16 %v672
      %v695 = vunpack.c.l.b16 %v673
      %v696 = vunpack.c.h.b16 %v673
      %v697 = vunpack.c.l.b16 %v674
      %v698 = vunpack.c.h.b16 %v674
      %v699 = vpack.c.b16 %v683, %v683
      %v700 = vpack.c.b16 %v684, %v684
      %v701 = vpack.c.b16 %v685, %v685
      %v702 = vpack.c.b16 %v686, %v686
      %v703 = vpack.c.b16 %v687, %v687
      %v704 = vpack.c.b16 %v688, %v688
      %v705 = vpack.c.b16 %v689, %v689
      %v706 = vpack.c.b16 %v690, %v690
      %v707 = vpack.c.b16 %v691, %v691
      %v708 = vpack.c.b16 %v692, %v692
      %v709 = vpack.c.b16 %v693, %v693
      %v710 = vpack.c.b16 %v694, %v694
      %v711 = vpack.c.b16 %v695, %v695
      %v712 = vpack.c.b16 %v696, %v696
      %v713 = vpack.c.b16 %v697, %v697
      %v714 = vpack.c.b16 %v698, %v698
      %731 = vst [vmem:[%s241] sm:$0xf] %v699
      %732 = vst [vmem:[%s241 + $0x4] sm:$0xf] %v700
      %733 = vst [vmem:[%s241 + $0x8] sm:$0xf] %v701
      %734 = vst [vmem:[%s241 + $0xc] sm:$0xf] %v702
      %735 = vst [vmem:[%s241 + $0x10] sm:$0xf] %v703
      %736 = vst [vmem:[%s241 + $0x14] sm:$0xf] %v704
      %737 = vst [vmem:[%s241 + $0x18] sm:$0xf] %v705
      %738 = vst [vmem:[%s241 + $0x1c] sm:$0xf] %v706
      %739 = vst [vmem:[%s241 + $0x20] sm:$0xf] %v707
      %740 = vst [vmem:[%s241 + $0x24] sm:$0xf] %v708
      %741 = vst [vmem:[%s241 + $0x28] sm:$0xf] %v709
      %742 = vst [vmem:[%s241 + $0x2c] sm:$0xf] %v710
      %743 = vst [vmem:[%s241 + $0x30] sm:$0xf] %v711
      %744 = vst [vmem:[%s241 + $0x34] sm:$0xf] %v712
      %745 = vst [vmem:[%s241 + $0x38] sm:$0xf] %v713
      %746 = vst [vmem:[%s241 + $0x3c] sm:$0xf] %v714
      %v747 = vpack.c.bf16 %v498, %v494
      %v748 = vpack.c.bf16 %v508, %v504
      %v749 = vpack.c.bf16 %v518, %v514
      %v750 = vpack.c.bf16 %v528, %v524
      %v751 = vpack.c.bf16 %v538, %v534
      %v752 = vpack.c.bf16 %v548, %v544
      %v753 = vpack.c.bf16 %v558, %v554
      %v754 = vpack.c.bf16 %v568, %v564
      %v763 = vunpack.c.l.b16 %v747
      %v764 = vunpack.c.h.b16 %v747
      %v765 = vunpack.c.l.b16 %v748
      %v766 = vunpack.c.h.b16 %v748
      %v767 = vunpack.c.l.b16 %v749
      %v768 = vunpack.c.h.b16 %v749
      %v769 = vunpack.c.l.b16 %v750
      %v770 = vunpack.c.h.b16 %v750
      %v771 = vunpack.c.l.b16 %v751
      %v772 = vunpack.c.h.b16 %v751
      %v773 = vunpack.c.l.b16 %v752
      %v774 = vunpack.c.h.b16 %v752
      %v775 = vunpack.c.l.b16 %v753
      %v776 = vunpack.c.h.b16 %v753
      %v777 = vunpack.c.l.b16 %v754
      %v778 = vunpack.c.h.b16 %v754
      %v779 = vpack.c.b16 %v763, %v763
      %v780 = vpack.c.b16 %v764, %v764
      %v781 = vpack.c.b16 %v765, %v765
      %v782 = vpack.c.b16 %v766, %v766
      %v783 = vpack.c.b16 %v767, %v767
      %v784 = vpack.c.b16 %v768, %v768
      %v785 = vpack.c.b16 %v769, %v769
      %v786 = vpack.c.b16 %v770, %v770
      %v787 = vpack.c.b16 %v771, %v771
      %v788 = vpack.c.b16 %v772, %v772
      %v789 = vpack.c.b16 %v773, %v773
      %v790 = vpack.c.b16 %v774, %v774
      %v791 = vpack.c.b16 %v775, %v775
      %v792 = vpack.c.b16 %v776, %v776
      %v793 = vpack.c.b16 %v777, %v777
      %v794 = vpack.c.b16 %v778, %v778
      %811 = vst [vmem:[%s247] sm:$0xf] %v779
      %812 = vst [vmem:[%s247 + $0x4] sm:$0xf] %v780
      %813 = vst [vmem:[%s247 + $0x8] sm:$0xf] %v781
      %814 = vst [vmem:[%s247 + $0xc] sm:$0xf] %v782
      %815 = vst [vmem:[%s247 + $0x10] sm:$0xf] %v783
      %816 = vst [vmem:[%s247 + $0x14] sm:$0xf] %v784
      %817 = vst [vmem:[%s247 + $0x18] sm:$0xf] %v785
      %818 = vst [vmem:[%s247 + $0x1c] sm:$0xf] %v786
      %819 = vst [vmem:[%s247 + $0x20] sm:$0xf] %v787
      %820 = vst [vmem:[%s247 + $0x24] sm:$0xf] %v788
      %821 = vst [vmem:[%s247 + $0x28] sm:$0xf] %v789
      %822 = vst [vmem:[%s247 + $0x2c] sm:$0xf] %v790
      %823 = vst [vmem:[%s247 + $0x30] sm:$0xf] %v791
      %824 = vst [vmem:[%s247 + $0x34] sm:$0xf] %v792
      %825 = vst [vmem:[%s247 + $0x38] sm:$0xf] %v793
      %826 = vst [vmem:[%s247 + $0x3c] sm:$0xf] %v794
      %v827 = vpack.c.bf16 %v608, %v605
      %v828 = vpack.c.bf16 %v616, %v613
      %v829 = vpack.c.bf16 %v624, %v621
      %v830 = vpack.c.bf16 %v632, %v629
      %v831 = vpack.c.bf16 %v640, %v637
      %v832 = vpack.c.bf16 %v648, %v645
      %v833 = vpack.c.bf16 %v656, %v653
      %v834 = vpack.c.bf16 %v664, %v661
      %v843 = vunpack.c.l.b16 %v827
      %v844 = vunpack.c.h.b16 %v827
      %v845 = vunpack.c.l.b16 %v828
      %v846 = vunpack.c.h.b16 %v828
      %v847 = vunpack.c.l.b16 %v829
      %v848 = vunpack.c.h.b16 %v829
      %v849 = vunpack.c.l.b16 %v830
      %v850 = vunpack.c.h.b16 %v830
      %v851 = vunpack.c.l.b16 %v831
      %v852 = vunpack.c.h.b16 %v831
      %v853 = vunpack.c.l.b16 %v832
      %v854 = vunpack.c.h.b16 %v832
      %v855 = vunpack.c.l.b16 %v833
      %v856 = vunpack.c.h.b16 %v833
      %v857 = vunpack.c.l.b16 %v834
      %v858 = vunpack.c.h.b16 %v834
      %v859 = vpack.c.b16 %v843, %v843
      %v860 = vpack.c.b16 %v844, %v844
      %v861 = vpack.c.b16 %v845, %v845
      %v862 = vpack.c.b16 %v846, %v846
      %v863 = vpack.c.b16 %v847, %v847
      %v864 = vpack.c.b16 %v848, %v848
      %v865 = vpack.c.b16 %v849, %v849
      %v866 = vpack.c.b16 %v850, %v850
      %v867 = vpack.c.b16 %v851, %v851
      %v868 = vpack.c.b16 %v852, %v852
      %v869 = vpack.c.b16 %v853, %v853
      %v870 = vpack.c.b16 %v854, %v854
      %v871 = vpack.c.b16 %v855, %v855
      %v872 = vpack.c.b16 %v856, %v856
      %v873 = vpack.c.b16 %v857, %v857
      %v874 = vpack.c.b16 %v858, %v858
      %891 = vst [vmem:[%s253] sm:$0xf] %v859
      %892 = vst [vmem:[%s253 + $0x4] sm:$0xf] %v860
      %893 = vst [vmem:[%s253 + $0x8] sm:$0xf] %v861
      %894 = vst [vmem:[%s253 + $0xc] sm:$0xf] %v862
      %895 = vst [vmem:[%s253 + $0x10] sm:$0xf] %v863
      %896 = vst [vmem:[%s253 + $0x14] sm:$0xf] %v864
      %897 = vst [vmem:[%s253 + $0x18] sm:$0xf] %v865
      %898 = vst [vmem:[%s253 + $0x1c] sm:$0xf] %v866
      %899 = vst [vmem:[%s253 + $0x20] sm:$0xf] %v867
      %900 = vst [vmem:[%s253 + $0x24] sm:$0xf] %v868
      %901 = vst [vmem:[%s253 + $0x28] sm:$0xf] %v869
      %902 = vst [vmem:[%s253 + $0x2c] sm:$0xf] %v870
      %903 = vst [vmem:[%s253 + $0x30] sm:$0xf] %v871
      %904 = vst [vmem:[%s253 + $0x34] sm:$0xf] %v872
      %905 = vst [vmem:[%s253 + $0x38] sm:$0xf] %v873
      %906 = vst [vmem:[%s253 + $0x3c] sm:$0xf] %v874
      %s907 = smul.u32 16, %s17
      %p908 = scmp.lt.s32.totalorder %s907, 31
      %s909 = scalar_select %p908, %s907, 31
      %s910 = smul.addr %s909, 4
      %s911 = scalar_lea.vmem %s3, %s910
      %s912 = smul.u32 16, %s17
      %p913 = scmp.lt.s32.totalorder %s912, 31
      %s914 = scalar_select %p913, %s912, 31
      %s915 = smul.addr %s914, 4
      %s916 = scalar_lea.vmem %s4, %s915
      %s917 = smul.u32 16, %s17
      %p918 = scmp.lt.s32.totalorder %s917, 31
      %s919 = scalar_select %p918, %s917, 31
      %s920 = smul.addr %s919, 4
      %s921 = scalar_lea.vmem %s5, %s920
      // Predicated region
      $region33: #{self_attention.2} parent=31 // pred_check
        %p922 = pneg %p103
      $region34: #{self_attention.2} parent=31 // pred_check_branch
        %924 = sbr.rel (%p922) target = $region36
      $region35: #{self_attention.2} parent=31 // pred_region
        %s925 = smul.u32 16, %s17
      $region36: #{self_attention.2} parent=31 // pred_fallthru
        _
      // Predicated region
      $region37: #{self_attention.2} parent=31 // pred_check
        %p926 = pneg %p129
      $region38: #{self_attention.2} parent=31 // pred_check_branch
        %928 = sbr.rel (%p926) target = $region40
      $region39: #{self_attention.2} parent=31 // pred_region
        %s929 = smul.u32 16, %s17
      $region40: #{self_attention.2} parent=31 // pred_fallthru
        _
      // Predicated region
      $region41: #{self_attention.2} parent=31 // pred_check
        %p930 = pneg %p155
      $region42: #{self_attention.2} parent=31 // pred_check_branch
        %932 = sbr.rel (%p930) target = $region44
      $region43: #{self_attention.2} parent=31 // pred_region
        %s933 = smul.u32 16, %s17
      $region44: #{self_attention.2} parent=31 // pred_fallthru
        _
    $region32: #{self_attention.2} parent=5 // pred_fallthru
      _
    %p934 = scmp.le.s32.totalorder 2, %s12
    // Predicated region
    $region45: #{self_attention.2} parent=5 // pred_check
      %p935 = pneg %p934
    $region46: #{self_attention.2} parent=5 // pred_check_branch
      %937 = sbr.rel (%p935) target = $region48
    $region47: #{self_attention.2} parent=5 // pred_region
      %s938 = ssub.s32 %s12, 2
      // Predicated region
      $region49: #{self_attention.2} parent=47 // pred_check
        %p939 = pneg %p109
      $region50: #{self_attention.2} parent=47 // pred_check_branch
        %941 = sbr.rel (%p939) target = $region52
      $region51: #{self_attention.2} parent=47 // pred_region
        %s942 = smul.u32 16, %s18
        %p943 = scmp.lt.s32.totalorder %s942, 31
        %s944 = scalar_select %p943, %s942, 31
        %s945 = smul.addr %s944, 4
        %s946 = scalar_lea.vmem %s3, %s945
      $region52: #{self_attention.2} parent=47 // pred_fallthru
        _
      // Predicated region
      $region53: #{self_attention.2} parent=47 // pred_check
        %p947 = pneg %p135
      $region54: #{self_attention.2} parent=47 // pred_check_branch
        %949 = sbr.rel (%p947) target = $region56
      $region55: #{self_attention.2} parent=47 // pred_region
        %s950 = smul.u32 16, %s18
        %p951 = scmp.lt.s32.totalorder %s950, 31
        %s952 = scalar_select %p951, %s950, 31
        %s953 = smul.addr %s952, 4
        %s954 = scalar_lea.vmem %s4, %s953
      $region56: #{self_attention.2} parent=47 // pred_fallthru
        _
      // Predicated region
      $region57: #{self_attention.2} parent=47 // pred_check
        %p955 = pneg %p161
      $region58: #{self_attention.2} parent=47 // pred_check_branch
        %957 = sbr.rel (%p955) target = $region60
      $region59: #{self_attention.2} parent=47 // pred_region
        %s958 = smul.u32 16, %s18
        %p959 = scmp.lt.s32.totalorder %s958, 31
        %s960 = scalar_select %p959, %s958, 31
        %s961 = smul.addr %s960, 4
        %s962 = scalar_lea.vmem %s5, %s961
      $region60: #{self_attention.2} parent=47 // pred_fallthru
        _
    $region48: #{self_attention.2} parent=5 // pred_fallthru
      _
  $region6: #{self_attention.2} parent=0 // loop_footer
    %s16 = sadd.s32 1, %s12
  $region7: #{self_attention.2} parent=0 // loop_footer_branch
    %11 = sbr.rel target = $region3
  $region8: #{self_attention.2} parent=0 // loop_exit
    _

// kernel: self_attention.3
$region0: #{self_attention.3}
  #allocation0 [shape = 'u32[]', space=smem, size = 0x4, offset = 0x4, fixed_abs, tag = 'smem constant byte address 0x4 - core index']
  #allocation1 [shape = 'u32[144,128]{1,0:T(1,128)}', space=vmem, size = 0x12000, scoped, tag = 'internal scratch']
  #allocation2 [shape = 'f32[1,1]{1,0:T(1,128)S(6)}', space=smem, size = 0x200, scoped, tag = 'scoped memory for self_attention.3']
  %s0 = inlined_call_operand.vmem [shape: bf16[256,128], index: 0, kind: input, shape index: {}]
  %s1 = inlined_call_operand.vmem [shape: bf16[256,128], index: 1, kind: input, shape index: {}]
  %s2 = inlined_call_operand.vmem [shape: bf16[256,128], index: 2, kind: input, shape index: {}]
  %s3 = inlined_call_operand.vmem [shape: f32[256,128], index: 3, kind: input, shape index: {}]
  %s4 = inlined_call_operand.<no memory space> [shape: f32[1,1], index: 4, kind: input, shape index: {}]
  %s5 = inlined_call_operand.hbm [shape: f32[256,128], index: 5, kind: output, shape index: {0}]
  %s6 = inlined_call_operand.hbm [shape: f32[256,256], index: 6, kind: output, shape index: {1}]
  %7 = xla_tuple %s5, %s6
  %s8 = sld [smem:[#allocation0]]
  $region61: #{self_attention.3} parent=0
    _
  %s10 = ssub.s32 1, %s8
  %s11 = scalar_select 0, %s10, %s8
  %12 = sst [smem:[#allocation2]] %s4
  $region1: #{self_attention.3} parent=0
    #allocation3 [shape = 'u8[131072]{0}', space=vmem, size = 0x20000, scoped, tag = 'output window, operand 0']
    #allocation4 [shape = 's32[2]{0}', space=sflag, size = 0x8, scoped, tag = 'scoped memory for self_attention.3']
    #allocation5 [shape = 'u8[262144]{0}', space=vmem, size = 0x40000, scoped, tag = 'output window, operand 1']
    #allocation6 [shape = 's32[2]{0}', space=sflag, size = 0x8, scoped, tag = 'scoped memory for self_attention.3']
    %13 = vsyncpa [#allocation4], 0
    %s14 = scalar_lea.sflag [#allocation4], 1
    %15 = vsyncpa %s14, 0
    %16 = vsyncpa [#allocation6], 0
    %s17 = scalar_lea.sflag [#allocation6], 1
    %18 = vsyncpa %s17, 0
    loop: start=0, step=1, limit=4
    $region2: #{self_attention.3} parent=1 // loop_pre_header
      _
    $region3: #{self_attention.3} parent=1 // loop_header
      %s20 = sphi 0, %s24
      %p21 = scmp.ge.s32.totalorder %s20, 4
      %s30 = sphi 0, %s32
      %s33 = sphi 0, %s30
      %s34 = sphi 0, %s33
      %s50 = sphi 0, %s34
      %s54 = sphi 0, %s54
      %s56 = sphi 0, %s54
      %s57 = sphi 0, %s56
      %s71 = sphi 0, %s57
      %s75 = sphi 0, %s75
      %s77 = sphi 0, %s75
      %s78 = sphi 0, %s77
      %s92 = sphi 0, %s78
      %s98 = sphi 0, %s100
      %s101 = sphi 0, %s98
      %s102 = sphi 0, %s101
      %s118 = sphi 0, %s102
      %s122 = sphi 0, %s122
      %s124 = sphi 0, %s122
      %s125 = sphi 0, %s124
      %s139 = sphi 0, %s125
      %s145 = sphi 0, %s147
      %s148 = sphi 0, %s145
      %s149 = sphi 0, %s148
      %s165 = sphi 0, %s149
      %s171 = sphi 0, %s173
      %s174 = sphi 0, %s171
      %s175 = sphi 0, %s174
      %s191 = sphi 0, %s175
    $region4: #{self_attention.3} parent=1 // loop_header_branch
      %23 = sbr.rel (%p21) target = $region8
    $region5: #{self_attention.3} parent=1 // loop_body
      %s25 = ssub.s32 %s20, 1
      %s26 = ssub.s32 %s20, 2
      %s27 = sadd.s32 %s20, 1
      %s28 = ssub.s32 %s20, %s27
      %p29 = scmp.eq.s32.totalorder %s28, 0
      %s31 = sadd.s32 %s30, 1
      %s32 = scalar_select %p29, %s30, %s31
      %p35 = pneg %p29
      %p36 = scmp.eq.s32.totalorder %s20, 1
      %p37 = por %p35, %p36
      %p38 = scmp.ne.s32.totalorder %s30, %s33
      %p39 = scmp.eq.s32.totalorder %s20, 0
      %p40 = por %p38, %p39
      %p41 = scmp.ne.s32.totalorder %s30, %s33
      %p42 = scmp.eq.s32.totalorder %s25, 1
      %p43 = por %p41, %p42
      %p44 = scmp.ne.s32.totalorder %s33, %s34
      %p45 = scmp.eq.s32.totalorder %s25, 0
      %p46 = por %p44, %p45
      %p47 = scmp.ne.s32.totalorder %s33, %s34
      %p48 = scmp.eq.s32.totalorder %s26, 1
      %p49 = por %p47, %p48
      %p51 = scmp.ne.s32.totalorder %s34, %s50
      %p52 = scmp.eq.s32.totalorder %s26, 0
      %p53 = por %p51, %p52
      %s55 = sadd.s32 %s54, 1
      %p58 = scmp.eq.s32.totalorder %s20, 1
      %p59 = scmp.ne.s32.totalorder %s54, %s56
      %p60 = scmp.eq.s32.totalorder %s20, 0
      %p61 = por %p59, %p60
      %p62 = scmp.ne.s32.totalorder %s54, %s56
      %p63 = scmp.eq.s32.totalorder %s25, 1
      %p64 = por %p62, %p63
      %p65 = scmp.ne.s32.totalorder %s56, %s57
      %p66 = scmp.eq.s32.totalorder %s25, 0
      %p67 = por %p65, %p66
      %p68 = scmp.ne.s32.totalorder %s56, %s57
      %p69 = scmp.eq.s32.totalorder %s26, 1
      %p70 = por %p68, %p69
      %p72 = scmp.ne.s32.totalorder %s57, %s71
      %p73 = scmp.eq.s32.totalorder %s26, 0
      %p74 = por %p72, %p73
      %s76 = sadd.s32 %s75, 1
      %p79 = scmp.eq.s32.totalorder %s20, 1
      %p80 = scmp.ne.s32.totalorder %s75, %s77
      %p81 = scmp.eq.s32.totalorder %s20, 0
      %p82 = por %p80, %p81
      %p83 = scmp.ne.s32.totalorder %s75, %s77
      %p84 = scmp.eq.s32.totalorder %s25, 1
      %p85 = por %p83, %p84
      %p86 = scmp.ne.s32.totalorder %s77, %s78
      %p87 = scmp.eq.s32.totalorder %s25, 0
      %p88 = por %p86, %p87
      %p89 = scmp.ne.s32.totalorder %s77, %s78
      %p90 = scmp.eq.s32.totalorder %s26, 1
      %p91 = por %p89, %p90
      %p93 = scmp.ne.s32.totalorder %s78, %s92
      %p94 = scmp.eq.s32.totalorder %s26, 0
      %p95 = por %p93, %p94
      %s96 = ssub.s32 %s20, %s27
      %p97 = scmp.eq.s32.totalorder %s96, 0
      %s99 = sadd.s32 %s98, 1
      %s100 = scalar_select %p97, %s98, %s99
      %p103 = pneg %p97
      %p104 = scmp.eq.s32.totalorder %s20, 1
      %p105 = por %p103, %p104
      %p106 = scmp.ne.s32.totalorder %s98, %s101
      %p107 = scmp.eq.s32.totalorder %s20, 0
      %p108 = por %p106, %p107
      %p109 = scmp.ne.s32.totalorder %s98, %s101
      %p110 = scmp.eq.s32.totalorder %s25, 1
      %p111 = por %p109, %p110
      %p112 = scmp.ne.s32.totalorder %s101, %s102
      %p113 = scmp.eq.s32.totalorder %s25, 0
      %p114 = por %p112, %p113
      %p115 = scmp.ne.s32.totalorder %s101, %s102
      %p116 = scmp.eq.s32.totalorder %s26, 1
      %p117 = por %p115, %p116
      %p119 = scmp.ne.s32.totalorder %s102, %s118
      %p120 = scmp.eq.s32.totalorder %s26, 0
      %p121 = por %p119, %p120
      %s123 = sadd.s32 %s122, 1
      %p126 = scmp.eq.s32.totalorder %s20, 1
      %p127 = scmp.ne.s32.totalorder %s122, %s124
      %p128 = scmp.eq.s32.totalorder %s20, 0
      %p129 = por %p127, %p128
      %p130 = scmp.ne.s32.totalorder %s122, %s124
      %p131 = scmp.eq.s32.totalorder %s25, 1
      %p132 = por %p130, %p131
      %p133 = scmp.ne.s32.totalorder %s124, %s125
      %p134 = scmp.eq.s32.totalorder %s25, 0
      %p135 = por %p133, %p134
      %p136 = scmp.ne.s32.totalorder %s124, %s125
      %p137 = scmp.eq.s32.totalorder %s26, 1
      %p138 = por %p136, %p137
      %p140 = scmp.ne.s32.totalorder %s125, %s139
      %p141 = scmp.eq.s32.totalorder %s26, 0
      %p142 = por %p140, %p141
      %s143 = ssub.s32 %s20, %s27
      %p144 = scmp.eq.s32.totalorder %s143, 0
      %s146 = sadd.s32 %s145, 1
      %s147 = scalar_select %p144, %s145, %s146
      %p150 = pneg %p144
      %p151 = scmp.eq.s32.totalorder %s20, 1
      %p152 = por %p150, %p151
      %p153 = scmp.ne.s32.totalorder %s145, %s148
      %p154 = scmp.eq.s32.totalorder %s20, 0
      %p155 = por %p153, %p154
      %p156 = scmp.ne.s32.totalorder %s145, %s148
      %p157 = scmp.eq.s32.totalorder %s25, 1
      %p158 = por %p156, %p157
      %p159 = scmp.ne.s32.totalorder %s148, %s149
      %p160 = scmp.eq.s32.totalorder %s25, 0
      %p161 = por %p159, %p160
      %p162 = scmp.ne.s32.totalorder %s148, %s149
      %p163 = scmp.eq.s32.totalorder %s26, 1
      %p164 = por %p162, %p163
      %p166 = scmp.ne.s32.totalorder %s149, %s165
      %p167 = scmp.eq.s32.totalorder %s26, 0
      %p168 = por %p166, %p167
      %s169 = ssub.s32 %s20, %s27
      %p170 = scmp.eq.s32.totalorder %s169, 0
      %s172 = sadd.s32 %s171, 1
      %s173 = scalar_select %p170, %s171, %s172
      %p176 = pneg %p170
      %p177 = scmp.eq.s32.totalorder %s20, 1
      %p178 = por %p176, %p177
      %p179 = scmp.ne.s32.totalorder %s171, %s174
      %p180 = scmp.eq.s32.totalorder %s20, 0
      %p181 = por %p179, %p180
      %p182 = scmp.ne.s32.totalorder %s171, %s174
      %p183 = scmp.eq.s32.totalorder %s25, 1
      %p184 = por %p182, %p183
      %p185 = scmp.ne.s32.totalorder %s174, %s175
      %p186 = scmp.eq.s32.totalorder %s25, 0
      %p187 = por %p185, %p186
      %p188 = scmp.ne.s32.totalorder %s174, %s175
      %p189 = scmp.eq.s32.totalorder %s26, 1
      %p190 = por %p188, %p189
      %p192 = scmp.ne.s32.totalorder %s175, %s191
      %p193 = scmp.eq.s32.totalorder %s26, 0
      %p194 = por %p192, %p193
      %p195 = scmp.le.s32.totalorder 1, %s20
      %p196 = scmp.lt.s32.totalorder %s20, 3
      %p197 = pnand %p195, %p196
      %p198 = pneg %p197
      // Predicated region
      $region9: #{self_attention.3} parent=5 // pred_check
        _
      $region10: #{self_attention.3} parent=5 // pred_check_branch
        %200 = sbr.rel (%p197) target = $region12
      $region11: #{self_attention.3} parent=5 // pred_region
        %s201 = ssub.s32 %s20, 1
        // Predicated region
        $region13: #{self_attention.3} parent=11 // pred_check
          %p202 = pneg %p67
        $region14: #{self_attention.3} parent=11 // pred_check_branch
          %204 = sbr.rel (%p202) target = $region16
        $region15: #{self_attention.3} parent=11 // pred_region
          _
        $region16: #{self_attention.3} parent=11 // pred_fallthru
          _
        // Predicated region
        $region17: #{self_attention.3} parent=11 // pred_check
          %p205 = pneg %p88
        $region18: #{self_attention.3} parent=11 // pred_check_branch
          %207 = sbr.rel (%p205) target = $region20
        $region19: #{self_attention.3} parent=11 // pred_region
          _
        $region20: #{self_attention.3} parent=11 // pred_fallthru
          _
        // Predicated region
        $region21: #{self_attention.3} parent=11 // pred_check
          %p208 = pneg %p135
        $region22: #{self_attention.3} parent=11 // pred_check_branch
          %210 = sbr.rel (%p208) target = $region24
        $region23: #{self_attention.3} parent=11 // pred_region
          _
        $region24: #{self_attention.3} parent=11 // pred_fallthru
          _
      $region12: #{self_attention.3} parent=5 // pred_fallthru
        _
      %p211 = scmp.lt.s32.totalorder %s20, 2
      // Predicated region
      $region25: #{self_attention.3} parent=5 // pred_check
        %p212 = pneg %p211
      $region26: #{self_attention.3} parent=5 // pred_check_branch
        %214 = sbr.rel (%p212) target = $region28
      $region27: #{self_attention.3} parent=5 // pred_region
        // Predicated region
        $region29: #{self_attention.3} parent=27 // pred_check
          %p215 = pneg %p40
        $region30: #{self_attention.3} parent=27 // pred_check_branch
          %217 = sbr.rel (%p215) target = $region32
        $region31: #{self_attention.3} parent=27 // pred_region
          %s218 = smul.u32 16, %s20
          %p219 = scmp.lt.s32.totalorder %s218, 31
          %s220 = scalar_select %p219, %s218, 31
          %s221 = smul.addr %s220, 4
          %s222 = scalar_lea.vmem %s0, %s221
          %s223 = smul.u32 16, %s20
        $region32: #{self_attention.3} parent=27 // pred_fallthru
          _
        // Predicated region
        $region33: #{self_attention.3} parent=27 // pred_check
          %p224 = pneg %p108
        $region34: #{self_attention.3} parent=27 // pred_check_branch
          %226 = sbr.rel (%p224) target = $region36
        $region35: #{self_attention.3} parent=27 // pred_region
          %s227 = smul.u32 16, %s20
          %p228 = scmp.lt.s32.totalorder %s227, 31
          %s229 = scalar_select %p228, %s227, 31
          %s230 = smul.addr %s229, 8
          %s231 = scalar_lea.vmem %s3, %s230
          %s232 = smul.u32 16, %s20
        $region36: #{self_attention.3} parent=27 // pred_fallthru
          _
      $region28: #{self_attention.3} parent=5 // pred_fallthru
        _
      %p233 = scmp.le.s32.totalorder 1, %s20
      %p234 = scmp.lt.s32.totalorder %s20, 3
      %p235 = pnand %p233, %p234
      %p236 = pneg %p235
      // Predicated region
      $region37: #{self_attention.3} parent=5 // pred_check
        _
      $region38: #{self_attention.3} parent=5 // pred_check_branch
        %238 = sbr.rel (%p235) target = $region40
      $region39: #{self_attention.3} parent=5 // pred_region
        %s239 = ssub.s32 %s20, 1
        %s240 = smul.u32 16, %s25
        %p241 = scmp.lt.s32.totalorder %s240, 31
        %s242 = scalar_select %p241, %s240, 31
        %s243 = smul.addr %s242, 4
        %s244 = scalar_lea.vmem %s0, %s243
        %p245 = pneg %p46
        %p246 = pneg %p43
        %p247 = pneg %p67
        %p248 = pneg %p64
        %p249 = pneg %p88
        %p250 = pneg %p85
        %s251 = smul.u32 16, %s25
        %p252 = scmp.lt.s32.totalorder %s251, 31
        %s253 = scalar_select %p252, %s251, 31
        %s254 = smul.addr %s253, 8
        %s255 = scalar_lea.vmem %s3, %s254
        %p256 = pneg %p114
        %p257 = pneg %p111
        %p258 = pneg %p135
        %p259 = pneg %p132
        %p260 = pneg %p161
        %p261 = pneg %p158
        %s262 = sand.u32 %s148, 1
        %s263 = scalar_lea.sflag [#allocation4], %s262
        %s264 = sand.u32 %s148, 1
        %s265 = smul.addr %s264, 128
        %s266 = scalar_lea.vmem [#allocation3], %s265
        %p267 = pneg %p187
        %p268 = pneg %p184
        %s269 = sand.u32 %s174, 1
        %s270 = scalar_lea.sflag [#allocation6], %s269
        %s271 = sand.u32 %s174, 1
        %s272 = smul.addr %s271, 256
        %s273 = scalar_lea.vmem [#allocation5], %s272
        %s274 = smul.u32 16, %s25
        %p275 = scmp.lt.s32.totalorder %s274, 31
        %s276 = scalar_select %p275, %s274, 31
        %s277 = smul.addr %s276, 4
        %s278 = scalar_lea.vmem %s0, %s277
        %s279 = smul.u32 16, %s25
        %s280 = smul.u32 16, %s25
        %p281 = scmp.lt.s32.totalorder %s280, 31
        %s282 = scalar_select %p281, %s280, 31
        %s283 = smul.addr %s282, 8
        %s284 = scalar_lea.vmem %s3, %s283
        %s285 = smul.u32 16, %s25
        %s286 = smul.u32 16, %s25
        %s287 = smul.u32 16, %s25
        %v289 = vld [vmem:[%s278] sm:$0xf]
        %v290 = vld [vmem:[%s278 + $0x4] sm:$0xf]
        %v291 = vld [vmem:[%s278 + $0x8] sm:$0xf]
        %v292 = vld [vmem:[%s278 + $0xc] sm:$0xf]
        %v293 = vld [vmem:[%s278 + $0x10] sm:$0xf]
        %v294 = vld [vmem:[%s278 + $0x14] sm:$0xf]
        %v295 = vld [vmem:[%s278 + $0x18] sm:$0xf]
        %v296 = vld [vmem:[%s278 + $0x1c] sm:$0xf]
        %v297 = vld [vmem:[%s278 + $0x20] sm:$0xf]
        %v298 = vld [vmem:[%s278 + $0x24] sm:$0xf]
        %v299 = vld [vmem:[%s278 + $0x28] sm:$0xf]
        %v300 = vld [vmem:[%s278 + $0x2c] sm:$0xf]
        %v301 = vld [vmem:[%s278 + $0x30] sm:$0xf]
        %v302 = vld [vmem:[%s278 + $0x34] sm:$0xf]
        %v303 = vld [vmem:[%s278 + $0x38] sm:$0xf]
        %v304 = vld [vmem:[%s278 + $0x3c] sm:$0xf]
        %v305 = vld [vmem:[%s1] sm:$0xf]
        %v306 = vld [vmem:[%s1 + $0x4] sm:$0xf]
        %v307 = vld [vmem:[%s1 + $0x8] sm:$0xf]
        %v308 = vld [vmem:[%s1 + $0xc] sm:$0xf]
        %v309 = vld [vmem:[%s1 + $0x10] sm:$0xf]
        %v310 = vld [vmem:[%s1 + $0x14] sm:$0xf]
        %v311 = vld [vmem:[%s1 + $0x18] sm:$0xf]
        %v312 = vld [vmem:[%s1 + $0x1c] sm:$0xf]
        %v313 = vld [vmem:[%s1 + $0x20] sm:$0xf]
        %v314 = vld [vmem:[%s1 + $0x24] sm:$0xf]
        %v315 = vld [vmem:[%s1 + $0x28] sm:$0xf]
        %v316 = vld [vmem:[%s1 + $0x2c] sm:$0xf]
        %v317 = vld [vmem:[%s1 + $0x30] sm:$0xf]
        %v318 = vld [vmem:[%s1 + $0x34] sm:$0xf]
        %v319 = vld [vmem:[%s1 + $0x38] sm:$0xf]
        %v320 = vld [vmem:[%s1 + $0x3c] sm:$0xf]
        %v321 = vld [vmem:[%s1 + $0x40] sm:$0xf]
        %v322 = vld [vmem:[%s1 + $0x44] sm:$0xf]
        %v323 = vld [vmem:[%s1 + $0x48] sm:$0xf]
        %v324 = vld [vmem:[%s1 + $0x4c] sm:$0xf]
        %v325 = vld [vmem:[%s1 + $0x50] sm:$0xf]
        %v326 = vld [vmem:[%s1 + $0x54] sm:$0xf]
        %v327 = vld [vmem:[%s1 + $0x58] sm:$0xf]
        %v328 = vld [vmem:[%s1 + $0x5c] sm:$0xf]
        %v329 = vld [vmem:[%s1 + $0x60] sm:$0xf]
        %v330 = vld [vmem:[%s1 + $0x64] sm:$0xf]
        %v331 = vld [vmem:[%s1 + $0x68] sm:$0xf]
        %v332 = vld [vmem:[%s1 + $0x6c] sm:$0xf]
        %v333 = vld [vmem:[%s1 + $0x70] sm:$0xf]
        %v334 = vld [vmem:[%s1 + $0x74] sm:$0xf]
        %v335 = vld [vmem:[%s1 + $0x78] sm:$0xf]
        %v336 = vld [vmem:[%s1 + $0x7c] sm:$0xf]
        %v337 = vld [vmem:[%s2] sm:$0xf]
        %v338 = vld [vmem:[%s2 + $0x4] sm:$0xf]
        %v339 = vld [vmem:[%s2 + $0x8] sm:$0xf]
        %v340 = vld [vmem:[%s2 + $0xc] sm:$0xf]
        %v341 = vld [vmem:[%s2 + $0x10] sm:$0xf]
        %v342 = vld [vmem:[%s2 + $0x14] sm:$0xf]
        %v343 = vld [vmem:[%s2 + $0x18] sm:$0xf]
        %v344 = vld [vmem:[%s2 + $0x1c] sm:$0xf]
        %v345 = vld [vmem:[%s2 + $0x20] sm:$0xf]
        %v346 = vld [vmem:[%s2 + $0x24] sm:$0xf]
        %v347 = vld [vmem:[%s2 + $0x28] sm:$0xf]
        %v348 = vld [vmem:[%s2 + $0x2c] sm:$0xf]
        %v349 = vld [vmem:[%s2 + $0x30] sm:$0xf]
        %v350 = vld [vmem:[%s2 + $0x34] sm:$0xf]
        %v351 = vld [vmem:[%s2 + $0x38] sm:$0xf]
        %v352 = vld [vmem:[%s2 + $0x3c] sm:$0xf]
        %v353 = vld [vmem:[%s2 + $0x40] sm:$0xf]
        %v354 = vld [vmem:[%s2 + $0x44] sm:$0xf]
        %v355 = vld [vmem:[%s2 + $0x48] sm:$0xf]
        %v356 = vld [vmem:[%s2 + $0x4c] sm:$0xf]
        %v357 = vld [vmem:[%s2 + $0x50] sm:$0xf]
        %v358 = vld [vmem:[%s2 + $0x54] sm:$0xf]
        %v359 = vld [vmem:[%s2 + $0x58] sm:$0xf]
        %v360 = vld [vmem:[%s2 + $0x5c] sm:$0xf]
        %v361 = vld [vmem:[%s2 + $0x60] sm:$0xf]
        %v362 = vld [vmem:[%s2 + $0x64] sm:$0xf]
        %v363 = vld [vmem:[%s2 + $0x68] sm:$0xf]
        %v364 = vld [vmem:[%s2 + $0x6c] sm:$0xf]
        %v365 = vld [vmem:[%s2 + $0x70] sm:$0xf]
        %v366 = vld [vmem:[%s2 + $0x74] sm:$0xf]
        %v367 = vld [vmem:[%s2 + $0x78] sm:$0xf]
        %v368 = vld [vmem:[%s2 + $0x7c] sm:$0xf]
        %v385 = vunpack.c.l.b16 %v289
        %v386 = vunpack.c.l.b16 %v290
        %v387 = vunpack.c.l.b16 %v291
        %v388 = vunpack.c.l.b16 %v292
        %v389 = vunpack.c.l.b16 %v293
        %v390 = vunpack.c.l.b16 %v294
        %v391 = vunpack.c.l.b16 %v295
        %v392 = vunpack.c.l.b16 %v296
        %v393 = vunpack.c.l.b16 %v297
        %v394 = vunpack.c.l.b16 %v298
        %v395 = vunpack.c.l.b16 %v299
        %v396 = vunpack.c.l.b16 %v300
        %v397 = vunpack.c.l.b16 %v301
        %v398 = vunpack.c.l.b16 %v302
        %v399 = vunpack.c.l.b16 %v303
        %v400 = vunpack.c.l.b16 %v304
        %v401 = vpack.c.b16 %v386, %v385
        %v402 = vpack.c.b16 %v388, %v387
        %v403 = vpack.c.b16 %v390, %v389
        %v404 = vpack.c.b16 %v392, %v391
        %v405 = vpack.c.b16 %v394, %v393
        %v406 = vpack.c.b16 %v396, %v395
        %v407 = vpack.c.b16 %v398, %v397
        %v408 = vpack.c.b16 %v400, %v399
        %v449 = vunpack.c.l.b16 %v305
        %v450 = vunpack.c.l.b16 %v306
        %v451 = vunpack.c.l.b16 %v307
        %v452 = vunpack.c.l.b16 %v308
        %v453 = vunpack.c.l.b16 %v309
        %v454 = vunpack.c.l.b16 %v310
        %v455 = vunpack.c.l.b16 %v311
        %v456 = vunpack.c.l.b16 %v312
        %v457 = vunpack.c.l.b16 %v313
        %v458 = vunpack.c.l.b16 %v314
        %v459 = vunpack.c.l.b16 %v315
        %v460 = vunpack.c.l.b16 %v316
        %v461 = vunpack.c.l.b16 %v317
        %v462 = vunpack.c.l.b16 %v318
        %v463 = vunpack.c.l.b16 %v319
        %v464 = vunpack.c.l.b16 %v320
        %v465 = vunpack.c.l.b16 %v321
        %v466 = vunpack.c.l.b16 %v322
        %v467 = vunpack.c.l.b16 %v323
        %v468 = vunpack.c.l.b16 %v324
        %v469 = vunpack.c.l.b16 %v325
        %v470 = vunpack.c.l.b16 %v326
        %v471 = vunpack.c.l.b16 %v327
        %v472 = vunpack.c.l.b16 %v328
        %v473 = vunpack.c.l.b16 %v329
        %v474 = vunpack.c.l.b16 %v330
        %v475 = vunpack.c.l.b16 %v331
        %v476 = vunpack.c.l.b16 %v332
        %v477 = vunpack.c.l.b16 %v333
        %v478 = vunpack.c.l.b16 %v334
        %v479 = vunpack.c.l.b16 %v335
        %v480 = vunpack.c.l.b16 %v336
        %v481 = vpack.c.b16 %v450, %v449
        %v482 = vpack.c.b16 %v452, %v451
        %v483 = vpack.c.b16 %v454, %v453
        %v484 = vpack.c.b16 %v456, %v455
        %v485 = vpack.c.b16 %v458, %v457
        %v486 = vpack.c.b16 %v460, %v459
        %v487 = vpack.c.b16 %v462, %v461
        %v488 = vpack.c.b16 %v464, %v463
        %v489 = vpack.c.b16 %v466, %v465
        %v490 = vpack.c.b16 %v468, %v467
        %v491 = vpack.c.b16 %v470, %v469
        %v492 = vpack.c.b16 %v472, %v471
        %v493 = vpack.c.b16 %v474, %v473
        %v494 = vpack.c.b16 %v476, %v475
        %v495 = vpack.c.b16 %v478, %v477
        %v496 = vpack.c.b16 %v480, %v479
        %513 = vmatprep.subr.bf16.mxu0 0
        %514 = vmatpush1.bf16.xpose.msra.mxu0 %v481
        %515 = vmatprep.subr.bf16.mxu0 0
        %516 = vmatpush1.bf16.xpose.msra.mxu0 %v482
        %517 = vmatprep.subr.bf16.mxu0 0
        %518 = vmatpush1.bf16.xpose.msra.mxu0 %v483
        %519 = vmatprep.subr.bf16.mxu0 0
        %520 = vmatpush1.bf16.xpose.msra.mxu0 %v484
        %521 = vmatprep.subr.bf16.mxu0 0
        %522 = vmatpush1.bf16.xpose.msra.mxu0 %v485
        %523 = vmatprep.subr.bf16.mxu0 0
        %524 = vmatpush1.bf16.xpose.msra.mxu0 %v486
        %525 = vmatprep.subr.bf16.mxu0 0
        %526 = vmatpush1.bf16.xpose.msra.mxu0 %v487
        %527 = vmatprep.subr.bf16.mxu0 0
        %528 = vmatpush1.bf16.xpose.msra.mxu0 %v488
        %529 = vmatprep.subr.bf16.mxu0 0
        %530 = vmatpush1.bf16.xpose.msra.mxu0 %v489
        %531 = vmatprep.subr.bf16.mxu0 0
        %532 = vmatpush1.bf16.xpose.msra.mxu0 %v490
        %533 = vmatprep.subr.bf16.mxu0 0
        %534 = vmatpush1.bf16.xpose.msra.mxu0 %v491
        %535 = vmatprep.subr.bf16.mxu0 0
        %536 = vmatpush1.bf16.xpose.msra.mxu0 %v492
        %537 = vmatprep.subr.bf16.mxu0 0
        %538 = vmatpush1.bf16.xpose.msra.mxu0 %v493
        %539 = vmatprep.subr.bf16.mxu0 0
        %540 = vmatpush1.bf16.xpose.msra.mxu0 %v494
        %541 = vmatprep.subr.bf16.mxu0 0
        %542 = vmatpush1.bf16.xpose.msra.mxu0 %v495
        %543 = vmatprep.subr.bf16.mxu0 0
        %544 = vmatpush1.bf16.xpose.msra.mxu0 %v496
        %545 = vmatprep.mubr.bf16.mxu0 0
        %546 = vmatmul.mubr.bf16.gmra.mrb[0].mxu0 %v401
        %v547 = vpop.f32.mrb[0].mxu0
        %v548 = vadd.f32 0.0, %v547
        %v549 = vpop.f32.mrb[0].mxu0
        %v550 = vadd.f32 0.0, %v549
        %v551 = vpop.f32.mrb[0].mxu0
        %v552 = vadd.f32 0.0, %v551
        %v553 = vpop.f32.mrb[0].mxu0
        %v554 = vadd.f32 0.0, %v553
        %555 = vmatprep.mubr.bf16.mxu0 0
        %556 = vmatmul.mubr.bf16.gmra.mrb[0].mxu0 %v402
        %v557 = vpop.f32.mrb[0].mxu0
        %v558 = vadd.f32 0.0, %v557
        %v559 = vpop.f32.mrb[0].mxu0
        %v560 = vadd.f32 0.0, %v559
        %v561 = vpop.f32.mrb[0].mxu0
        %v562 = vadd.f32 0.0, %v561
        %v563 = vpop.f32.mrb[0].mxu0
        %v564 = vadd.f32 0.0, %v563
        %565 = vmatprep.mubr.bf16.mxu0 0
        %566 = vmatmul.mubr.bf16.gmra.mrb[0].mxu0 %v403
        %v567 = vpop.f32.mrb[0].mxu0
        %v568 = vadd.f32 0.0, %v567
        %v569 = vpop.f32.mrb[0].mxu0
        %v570 = vadd.f32 0.0, %v569
        %v571 = vpop.f32.mrb[0].mxu0
        %v572 = vadd.f32 0.0, %v571
        %v573 = vpop.f32.mrb[0].mxu0
        %v574 = vadd.f32 0.0, %v573
        %575 = vmatprep.mubr.bf16.mxu0 0
        %576 = vmatmul.mubr.bf16.gmra.mrb[0].mxu0 %v404
        %v577 = vpop.f32.mrb[0].mxu0
        %v578 = vadd.f32 0.0, %v577
        %v579 = vpop.f32.mrb[0].mxu0
        %v580 = vadd.f32 0.0, %v579
        %v581 = vpop.f32.mrb[0].mxu0
        %v582 = vadd.f32 0.0, %v581
        %v583 = vpop.f32.mrb[0].mxu0
        %v584 = vadd.f32 0.0, %v583
        %585 = vmatprep.mubr.bf16.mxu0 0
        %586 = vmatmul.mubr.bf16.gmra.mrb[0].mxu0 %v405
        %v587 = vpop.f32.mrb[0].mxu0
        %v588 = vadd.f32 0.0, %v587
        %v589 = vpop.f32.mrb[0].mxu0
        %v590 = vadd.f32 0.0, %v589
        %v591 = vpop.f32.mrb[0].mxu0
        %v592 = vadd.f32 0.0, %v591
        %v593 = vpop.f32.mrb[0].mxu0
        %v594 = vadd.f32 0.0, %v593
        %595 = vmatprep.mubr.bf16.mxu0 0
        %596 = vmatmul.mubr.bf16.gmra.mrb[0].mxu0 %v406
        %v597 = vpop.f32.mrb[0].mxu0
        %v598 = vadd.f32 0.0, %v597
        %v599 = vpop.f32.mrb[0].mxu0
        %v600 = vadd.f32 0.0, %v599
        %v601 = vpop.f32.mrb[0].mxu0
        %v602 = vadd.f32 0.0, %v601
        %v603 = vpop.f32.mrb[0].mxu0
        %v604 = vadd.f32 0.0, %v603
        %605 = vmatprep.mubr.bf16.mxu0 0
        %606 = vmatmul.mubr.bf16.gmra.mrb[0].mxu0 %v407
        %v607 = vpop.f32.mrb[0].mxu0
        %v608 = vadd.f32 0.0, %v607
        %v609 = vpop.f32.mrb[0].mxu0
        %v610 = vadd.f32 0.0, %v609
        %v611 = vpop.f32.mrb[0].mxu0
        %v612 = vadd.f32 0.0, %v611
        %v613 = vpop.f32.mrb[0].mxu0
        %v614 = vadd.f32 0.0, %v613
        %615 = vmatprep.mubr.bf16.mxu0 0
        %616 = vmatmul.mubr.bf16.gmra.mrb[0].mxu0 %v408
        %v617 = vpop.f32.mrb[0].mxu0
        %v618 = vadd.f32 0.0, %v617
        %v619 = vpop.f32.mrb[0].mxu0
        %v620 = vadd.f32 0.0, %v619
        %v621 = vpop.f32.mrb[0].mxu0
        %v622 = vadd.f32 0.0, %v621
        %v623 = vpop.f32.mrb[0].mxu0
        %v624 = vadd.f32 0.0, %v623
        %625 = vdwg.mxu0
        %v626 = vmax.f32 %v548, %v550
        %627 = vmax.xlane.f32.xlu0 %v626
        %v628 = vpop.xlane.xlu0 %627
        %v629 = vmax.f32 %v552, %v554
        %630 = vmax.xlane.f32.xlu0 %v629
        %v631 = vpop.xlane.xlu0 %630
        %v632 = vmax.f32 %v558, %v560
        %633 = vmax.xlane.f32.xlu0 %v632
        %v634 = vpop.xlane.xlu0 %633
        %v635 = vmax.f32 %v562, %v564
        %636 = vmax.xlane.f32.xlu0 %v635
        %v637 = vpop.xlane.xlu0 %636
        %v638 = vmax.f32 %v568, %v570
        %639 = vmax.xlane.f32.xlu0 %v638
        %v640 = vpop.xlane.xlu0 %639
        %v641 = vmax.f32 %v572, %v574
        %642 = vmax.xlane.f32.xlu0 %v641
        %v643 = vpop.xlane.xlu0 %642
        %v644 = vmax.f32 %v578, %v580
        %645 = vmax.xlane.f32.xlu0 %v644
        %v646 = vpop.xlane.xlu0 %645
        %v647 = vmax.f32 %v582, %v584
        %648 = vmax.xlane.f32.xlu0 %v647
        %v649 = vpop.xlane.xlu0 %648
        %v650 = vmax.f32 %v588, %v590
        %651 = vmax.xlane.f32.xlu0 %v650
        %v652 = vpop.xlane.xlu0 %651
        %v653 = vmax.f32 %v592, %v594
        %654 = vmax.xlane.f32.xlu0 %v653
        %v655 = vpop.xlane.xlu0 %654
        %v656 = vmax.f32 %v598, %v600
        %657 = vmax.xlane.f32.xlu0 %v656
        %v658 = vpop.xlane.xlu0 %657
        %v659 = vmax.f32 %v602, %v604
        %660 = vmax.xlane.f32.xlu0 %v659
        %v661 = vpop.xlane.xlu0 %660
        %v662 = vmax.f32 %v608, %v610
        %663 = vmax.xlane.f32.xlu0 %v662
        %v664 = vpop.xlane.xlu0 %663
        %v665 = vmax.f32 %v612, %v614
        %666 = vmax.xlane.f32.xlu0 %v665
        %v667 = vpop.xlane.xlu0 %666
        %v668 = vmax.f32 %v618, %v620
        %669 = vmax.xlane.f32.xlu0 %v668
        %v670 = vpop.xlane.xlu0 %669
        %v671 = vmax.f32 %v622, %v624
        %672 = vmax.xlane.f32.xlu0 %v671
        %v673 = vpop.xlane.xlu0 %672
        %v674 = vsub.f32 %v548, %v628
        %v675 = vsub.f32 %v550, %v628
        %v676 = vsub.f32 %v552, %v631
        %v677 = vsub.f32 %v554, %v631
        %v678 = vsub.f32 %v558, %v634
        %v679 = vsub.f32 %v560, %v634
        %v680 = vsub.f32 %v562, %v637
        %v681 = vsub.f32 %v564, %v637
        %v682 = vsub.f32 %v568, %v640
        %v683 = vsub.f32 %v570, %v640
        %v684 = vsub.f32 %v572, %v643
        %v685 = vsub.f32 %v574, %v643
        %v686 = vsub.f32 %v578, %v646
        %v687 = vsub.f32 %v580, %v646
        %v688 = vsub.f32 %v582, %v649
        %v689 = vsub.f32 %v584, %v649
        %v690 = vsub.f32 %v588, %v652
        %v691 = vsub.f32 %v590, %v652
        %v692 = vsub.f32 %v592, %v655
        %v693 = vsub.f32 %v594, %v655
        %v694 = vsub.f32 %v598, %v658
        %v695 = vsub.f32 %v600, %v658
        %v696 = vsub.f32 %v602, %v661
        %v697 = vsub.f32 %v604, %v661
        %v698 = vsub.f32 %v608, %v664
        %v699 = vsub.f32 %v610, %v664
        %v700 = vsub.f32 %v612, %v667
        %v701 = vsub.f32 %v614, %v667
        %v702 = vsub.f32 %v618, %v670
        %v703 = vsub.f32 %v620, %v670
        %v704 = vsub.f32 %v622, %v673
        %v705 = vsub.f32 %v624, %v673
        %v706 = vmul.f32 %v674, 1.442695
        %v707 = vpow.pop %v706
        %v708 = vmul.f32 %v675, 1.442695
        %v709 = vpow.pop %v708
        %v710 = vmul.f32 %v676, 1.442695
        %v711 = vpow.pop %v710
        %v712 = vmul.f32 %v677, 1.442695
        %v713 = vpow.pop %v712
        %v714 = vmul.f32 %v678, 1.442695
        %v715 = vpow.pop %v714
        %v716 = vmul.f32 %v679, 1.442695
        %v717 = vpow.pop %v716
        %v718 = vmul.f32 %v680, 1.442695
        %v719 = vpow.pop %v718
        %v720 = vmul.f32 %v681, 1.442695
        %v721 = vpow.pop %v720
        %v722 = vmul.f32 %v682, 1.442695
        %v723 = vpow.pop %v722
        %v724 = vmul.f32 %v683, 1.442695
        %v725 = vpow.pop %v724
        %v726 = vmul.f32 %v684, 1.442695
        %v727 = vpow.pop %v726
        %v728 = vmul.f32 %v685, 1.442695
        %v729 = vpow.pop %v728
        %v730 = vmul.f32 %v686, 1.442695
        %v731 = vpow.pop %v730
        %v732 = vmul.f32 %v687, 1.442695
        %v733 = vpow.pop %v732
        %v734 = vmul.f32 %v688, 1.442695
        %v735 = vpow.pop %v734
        %v736 = vmul.f32 %v689, 1.442695
        %v737 = vpow.pop %v736
        %v738 = vmul.f32 %v690, 1.442695
        %v739 = vpow.pop %v738
        %v740 = vmul.f32 %v691, 1.442695
        %v741 = vpow.pop %v740
        %v742 = vmul.f32 %v692, 1.442695
        %v743 = vpow.pop %v742
        %v744 = vmul.f32 %v693, 1.442695
        %v745 = vpow.pop %v744
        %v746 = vmul.f32 %v694, 1.442695
        %v747 = vpow.pop %v746
        %v748 = vmul.f32 %v695, 1.442695
        %v749 = vpow.pop %v748
        %v750 = vmul.f32 %v696, 1.442695
        %v751 = vpow.pop %v750
        %v752 = vmul.f32 %v697, 1.442695
        %v753 = vpow.pop %v752
        %v754 = vmul.f32 %v698, 1.442695
        %v755 = vpow.pop %v754
        %v756 = vmul.f32 %v699, 1.442695
        %v757 = vpow.pop %v756
        %v758 = vmul.f32 %v700, 1.442695
        %v759 = vpow.pop %v758
        %v760 = vmul.f32 %v701, 1.442695
        %v761 = vpow.pop %v760
        %v762 = vmul.f32 %v702, 1.442695
        %v763 = vpow.pop %v762
        %v764 = vmul.f32 %v703, 1.442695
        %v765 = vpow.pop %v764
        %v766 = vmul.f32 %v704, 1.442695
        %v767 = vpow.pop %v766
        %v768 = vmul.f32 %v705, 1.442695
        %v769 = vpow.pop %v768
        %v770 = vadd.f32 %v707, %v709
        %771 = vadd.xlane.f32.xlu0 %v770
        %v772 = vpop.xlane.xlu0 %771
        %v773 = vadd.f32 %v711, %v713
        %774 = vadd.xlane.f32.xlu0 %v773
        %v775 = vpop.xlane.xlu0 %774
        %v776 = vadd.f32 %v715, %v717
        %777 = vadd.xlane.f32.xlu0 %v776
        %v778 = vpop.xlane.xlu0 %777
        %v779 = vadd.f32 %v719, %v721
        %780 = vadd.xlane.f32.xlu0 %v779
        %v781 = vpop.xlane.xlu0 %780
        %v782 = vadd.f32 %v723, %v725
        %783 = vadd.xlane.f32.xlu0 %v782
        %v784 = vpop.xlane.xlu0 %783
        %v785 = vadd.f32 %v727, %v729
        %786 = vadd.xlane.f32.xlu0 %v785
        %v787 = vpop.xlane.xlu0 %786
        %v788 = vadd.f32 %v731, %v733
        %789 = vadd.xlane.f32.xlu0 %v788
        %v790 = vpop.xlane.xlu0 %789
        %v791 = vadd.f32 %v735, %v737
        %792 = vadd.xlane.f32.xlu0 %v791
        %v793 = vpop.xlane.xlu0 %792
        %v794 = vadd.f32 %v739, %v741
        %795 = vadd.xlane.f32.xlu0 %v794
        %v796 = vpop.xlane.xlu0 %795
        %v797 = vadd.f32 %v743, %v745
        %798 = vadd.xlane.f32.xlu0 %v797
        %v799 = vpop.xlane.xlu0 %798
        %v800 = vadd.f32 %v747, %v749
        %801 = vadd.xlane.f32.xlu0 %v800
        %v802 = vpop.xlane.xlu0 %801
        %v803 = vadd.f32 %v751, %v753
        %804 = vadd.xlane.f32.xlu0 %v803
        %v805 = vpop.xlane.xlu0 %804
        %v806 = vadd.f32 %v755, %v757
        %807 = vadd.xlane.f32.xlu0 %v806
        %v808 = vpop.xlane.xlu0 %807
        %v809 = vadd.f32 %v759, %v761
        %810 = vadd.xlane.f32.xlu0 %v809
        %v811 = vpop.xlane.xlu0 %810
        %v812 = vadd.f32 %v763, %v765
        %813 = vadd.xlane.f32.xlu0 %v812
        %v814 = vpop.xlane.xlu0 %813
        %v815 = vadd.f32 %v767, %v769
        %816 = vadd.xlane.f32.xlu0 %v815
        %v817 = vpop.xlane.xlu0 %816
        %v818 = vrcp.pop %v772
        %v819 = vrcp.pop %v775
        %v820 = vrcp.pop %v778
        %v821 = vrcp.pop %v781
        %v822 = vrcp.pop %v784
        %v823 = vrcp.pop %v787
        %v824 = vrcp.pop %v790
        %v825 = vrcp.pop %v793
        %v826 = vrcp.pop %v796
        %v827 = vrcp.pop %v799
        %v828 = vrcp.pop %v802
        %v829 = vrcp.pop %v805
        %v830 = vrcp.pop %v808
        %v831 = vrcp.pop %v811
        %v832 = vrcp.pop %v814
        %v833 = vrcp.pop %v817
        %v834 = vmul.f32 %v707, %v818
        %v835 = vmul.f32 %v709, %v818
        %v836 = vmul.f32 %v711, %v819
        %v837 = vmul.f32 %v713, %v819
        %v838 = vmul.f32 %v715, %v820
        %v839 = vmul.f32 %v717, %v820
        %v840 = vmul.f32 %v719, %v821
        %v841 = vmul.f32 %v721, %v821
        %v842 = vmul.f32 %v723, %v822
        %v843 = vmul.f32 %v725, %v822
        %v844 = vmul.f32 %v727, %v823
        %v845 = vmul.f32 %v729, %v823
        %v846 = vmul.f32 %v731, %v824
        %v847 = vmul.f32 %v733, %v824
        %v848 = vmul.f32 %v735, %v825
        %v849 = vmul.f32 %v737, %v825
        %v850 = vmul.f32 %v739, %v826
        %v851 = vmul.f32 %v741, %v826
        %v852 = vmul.f32 %v743, %v827
        %v853 = vmul.f32 %v745, %v827
        %v854 = vmul.f32 %v747, %v828
        %v855 = vmul.f32 %v749, %v828
        %v856 = vmul.f32 %v751, %v829
        %v857 = vmul.f32 %v753, %v829
        %v858 = vmul.f32 %v755, %v830
        %v859 = vmul.f32 %v757, %v830
        %v860 = vmul.f32 %v759, %v831
        %v861 = vmul.f32 %v761, %v831
        %v862 = vmul.f32 %v763, %v832
        %v863 = vmul.f32 %v765, %v832
        %v864 = vmul.f32 %v767, %v833
        %v865 = vmul.f32 %v769, %v833
        %866 = vst [vmem:[%s273] sm:$0xff] %v834
        %867 = vst [vmem:[%s273 + $0x8] sm:$0xff] %v835
        %868 = vst [vmem:[%s273 + $0x10] sm:$0xff] %v836
        %869 = vst [vmem:[%s273 + $0x18] sm:$0xff] %v837
        %870 = vst [vmem:[%s273 + $0x20] sm:$0xff] %v838
        %871 = vst [vmem:[%s273 + $0x28] sm:$0xff] %v839
        %872 = vst [vmem:[%s273 + $0x30] sm:$0xff] %v840
        %873 = vst [vmem:[%s273 + $0x38] sm:$0xff] %v841
        %874 = vst [vmem:[%s273 + $0x40] sm:$0xff] %v842
        %875 = vst [vmem:[%s273 + $0x48] sm:$0xff] %v843
        %876 = vst [vmem:[%s273 + $0x50] sm:$0xff] %v844
        %877 = vst [vmem:[%s273 + $0x58] sm:$0xff] %v845
        %878 = vst [vmem:[%s273 + $0x60] sm:$0xff] %v846
        %879 = vst [vmem:[%s273 + $0x68] sm:$0xff] %v847
        %880 = vst [vmem:[%s273 + $0x70] sm:$0xff] %v848
        %881 = vst [vmem:[%s273 + $0x78] sm:$0xff] %v849
        %882 = vst [vmem:[%s273 + $0x80] sm:$0xff] %v850
        %883 = vst [vmem:[%s273 + $0x88] sm:$0xff] %v851
        %884 = vst [vmem:[%s273 + $0x90] sm:$0xff] %v852
        %885 = vst [vmem:[%s273 + $0x98] sm:$0xff] %v853
        %886 = vst [vmem:[%s273 + $0xa0] sm:$0xff] %v854
        %887 = vst [vmem:[%s273 + $0xa8] sm:$0xff] %v855
        %888 = vst [vmem:[%s273 + $0xb0] sm:$0xff] %v856
        %889 = vst [vmem:[%s273 + $0xb8] sm:$0xff] %v857
        %890 = vst [vmem:[%s273 + $0xc0] sm:$0xff] %v858
        %891 = vst [vmem:[%s273 + $0xc8] sm:$0xff] %v859
        %892 = vst [vmem:[%s273 + $0xd0] sm:$0xff] %v860
        %893 = vst [vmem:[%s273 + $0xd8] sm:$0xff] %v861
        %894 = vst [vmem:[%s273 + $0xe0] sm:$0xff] %v862
        %895 = vst [vmem:[%s273 + $0xe8] sm:$0xff] %v863
        %896 = vst [vmem:[%s273 + $0xf0] sm:$0xff] %v864
        %897 = vst [vmem:[%s273 + $0xf8] sm:$0xff] %v865
        %v898 = vpack.c.bf16 %v836, %v834
        %v899 = vpack.c.bf16 %v837, %v835
        %v900 = vpack.c.bf16 %v840, %v838
        %v901 = vpack.c.bf16 %v841, %v839
        %v902 = vpack.c.bf16 %v844, %v842
        %v903 = vpack.c.bf16 %v845, %v843
        %v904 = vpack.c.bf16 %v848, %v846
        %v905 = vpack.c.bf16 %v849, %v847
        %v906 = vpack.c.bf16 %v852, %v850
        %v907 = vpack.c.bf16 %v853, %v851
        %v908 = vpack.c.bf16 %v856, %v854
        %v909 = vpack.c.bf16 %v857, %v855
        %v910 = vpack.c.bf16 %v860, %v858
        %v911 = vpack.c.bf16 %v861, %v859
        %v912 = vpack.c.bf16 %v864, %v862
        %v913 = vpack.c.bf16 %v865, %v863
        %v946 = vunpack.c.l.b16 %v337
        %v947 = vunpack.c.l.b16 %v338
        %v948 = vunpack.c.l.b16 %v339
        %v949 = vunpack.c.l.b16 %v340
        %v950 = vunpack.c.l.b16 %v341
        %v951 = vunpack.c.l.b16 %v342
        %v952 = vunpack.c.l.b16 %v343
        %v953 = vunpack.c.l.b16 %v344
        %v954 = vunpack.c.l.b16 %v345
        %v955 = vunpack.c.l.b16 %v346
        %v956 = vunpack.c.l.b16 %v347
        %v957 = vunpack.c.l.b16 %v348
        %v958 = vunpack.c.l.b16 %v349
        %v959 = vunpack.c.l.b16 %v350
        %v960 = vunpack.c.l.b16 %v351
        %v961 = vunpack.c.l.b16 %v352
        %v962 = vunpack.c.l.b16 %v353
        %v963 = vunpack.c.l.b16 %v354
        %v964 = vunpack.c.l.b16 %v355
        %v965 = vunpack.c.l.b16 %v356
        %v966 = vunpack.c.l.b16 %v357
        %v967 = vunpack.c.l.b16 %v358
        %v968 = vunpack.c.l.b16 %v359
        %v969 = vunpack.c.l.b16 %v360
        %v970 = vunpack.c.l.b16 %v361
        %v971 = vunpack.c.l.b16 %v362
        %v972 = vunpack.c.l.b16 %v363
        %v973 = vunpack.c.l.b16 %v364
        %v974 = vunpack.c.l.b16 %v365
        %v975 = vunpack.c.l.b16 %v366
        %v976 = vunpack.c.l.b16 %v367
        %v977 = vunpack.c.l.b16 %v368
        %v978 = vpack.c.b16 %v947, %v946
        %v979 = vpack.c.b16 %v949, %v948
        %v980 = vpack.c.b16 %v951, %v950
        %v981 = vpack.c.b16 %v953, %v952
        %v982 = vpack.c.b16 %v955, %v954
        %v983 = vpack.c.b16 %v957, %v956
        %v984 = vpack.c.b16 %v959, %v958
        %v985 = vpack.c.b16 %v961, %v960
        %v986 = vpack.c.b16 %v963, %v962
        %v987 = vpack.c.b16 %v965, %v964
        %v988 = vpack.c.b16 %v967, %v966
        %v989 = vpack.c.b16 %v969, %v968
        %v990 = vpack.c.b16 %v971, %v970
        %v991 = vpack.c.b16 %v973, %v972
        %v992 = vpack.c.b16 %v975, %v974
        %v993 = vpack.c.b16 %v977, %v976
        %1010 = vmatprep.subr.bf16.mxu0 0
        %1011 = vmatpush1.bf16.msra.mxu0 %v978
        %1012 = vmatprep.subr.bf16.mxu0 0
        %1013 = vmatpush1.bf16.msra.mxu0 %v979
        %1014 = vmatprep.subr.bf16.mxu0 0
        %1015 = vmatpush1.bf16.msra.mxu0 %v980
        %1016 = vmatprep.subr.bf16.mxu0 0
        %1017 = vmatpush1.bf16.msra.mxu0 %v981
        %1018 = vmatprep.subr.bf16.mxu0 0
        %1019 = vmatpush1.bf16.msra.mxu0 %v982
        %1020 = vmatprep.subr.bf16.mxu0 0
        %1021 = vmatpush1.bf16.msra.mxu0 %v983
        %1022 = vmatprep.subr.bf16.mxu0 0
        %1023 = vmatpush1.bf16.msra.mxu0 %v984
        %1024 = vmatprep.subr.bf16.mxu0 0
        %1025 = vmatpush1.bf16.msra.mxu0 %v985
        %1026 = vmatprep.subr.bf16.mxu0 0
        %1027 = vmatpush1.bf16.msra.mxu0 %v986
        %1028 = vmatprep.subr.bf16.mxu0 0
        %1029 = vmatpush1.bf16.msra.mxu0 %v987
        %1030 = vmatprep.subr.bf16.mxu0 0
        %1031 = vmatpush1.bf16.msra.mxu0 %v988
        %1032 = vmatprep.subr.bf16.mxu0 0
        %1033 = vmatpush1.bf16.msra.mxu0 %v989
        %1034 = vmatprep.subr.bf16.mxu0 0
        %1035 = vmatpush1.bf16.msra.mxu0 %v990
        %1036 = vmatprep.subr.bf16.mxu0 0
        %1037 = vmatpush1.bf16.msra.mxu0 %v991
        %1038 = vmatprep.subr.bf16.mxu0 0
        %1039 = vmatpush1.bf16.msra.mxu0 %v992
        %1040 = vmatprep.subr.bf16.mxu0 0
        %1041 = vmatpush1.bf16.msra.mxu0 %v993
        %1042 = vmatprep.mubr.bf16.mxu0 %v899
        %1043 = vmatmul.mubr.bf16.gmra.mrb[0].mxu0 %v898
        %v1044 = vpop.f32.mrb[0].mxu0
        %v1045 = vadd.f32 0.0, %v1044
        %v1046 = vpop.f32.mrb[0].mxu0
        %v1047 = vpop.f32.mrb[0].mxu0
        %v1048 = vadd.f32 0.0, %v1047
        %v1049 = vpop.f32.mrb[0].mxu0
        %1050 = vmatprep.mubr.bf16.mxu0 %v901
        %1051 = vmatmul.mubr.bf16.gmra.mrb[0].mxu0 %v900
        %v1052 = vpop.f32.mrb[0].mxu0
        %v1053 = vadd.f32 0.0, %v1052
        %v1054 = vpop.f32.mrb[0].mxu0
        %v1055 = vpop.f32.mrb[0].mxu0
        %v1056 = vadd.f32 0.0, %v1055
        %v1057 = vpop.f32.mrb[0].mxu0
        %1058 = vmatprep.mubr.bf16.mxu0 %v903
        %1059 = vmatmul.mubr.bf16.gmra.mrb[0].mxu0 %v902
        %v1060 = vpop.f32.mrb[0].mxu0
        %v1061 = vadd.f32 0.0, %v1060
        %v1062 = vpop.f32.mrb[0].mxu0
        %v1063 = vpop.f32.mrb[0].mxu0
        %v1064 = vadd.f32 0.0, %v1063
        %v1065 = vpop.f32.mrb[0].mxu0
        %1066 = vmatprep.mubr.bf16.mxu0 %v905
        %1067 = vmatmul.mubr.bf16.gmra.mrb[0].mxu0 %v904
        %v1068 = vpop.f32.mrb[0].mxu0
        %v1069 = vadd.f32 0.0, %v1068
        %v1070 = vpop.f32.mrb[0].mxu0
        %v1071 = vpop.f32.mrb[0].mxu0
        %v1072 = vadd.f32 0.0, %v1071
        %v1073 = vpop.f32.mrb[0].mxu0
        %1074 = vmatprep.mubr.bf16.mxu0 %v907
        %1075 = vmatmul.mubr.bf16.gmra.mrb[0].mxu0 %v906
        %v1076 = vpop.f32.mrb[0].mxu0
        %v1077 = vadd.f32 0.0, %v1076
        %v1078 = vpop.f32.mrb[0].mxu0
        %v1079 = vpop.f32.mrb[0].mxu0
        %v1080 = vadd.f32 0.0, %v1079
        %v1081 = vpop.f32.mrb[0].mxu0
        %1082 = vmatprep.mubr.bf16.mxu0 %v909
        %1083 = vmatmul.mubr.bf16.gmra.mrb[0].mxu0 %v908
        %v1084 = vpop.f32.mrb[0].mxu0
        %v1085 = vadd.f32 0.0, %v1084
        %v1086 = vpop.f32.mrb[0].mxu0
        %v1087 = vpop.f32.mrb[0].mxu0
        %v1088 = vadd.f32 0.0, %v1087
        %v1089 = vpop.f32.mrb[0].mxu0
        %1090 = vmatprep.mubr.bf16.mxu0 %v911
        %1091 = vmatmul.mubr.bf16.gmra.mrb[0].mxu0 %v910
        %v1092 = vpop.f32.mrb[0].mxu0
        %v1093 = vadd.f32 0.0, %v1092
        %v1094 = vpop.f32.mrb[0].mxu0
        %v1095 = vpop.f32.mrb[0].mxu0
        %v1096 = vadd.f32 0.0, %v1095
        %v1097 = vpop.f32.mrb[0].mxu0
        %1098 = vmatprep.mubr.bf16.mxu0 %v913
        %1099 = vmatmul.mubr.bf16.gmra.mrb[0].mxu0 %v912
        %v1100 = vpop.f32.mrb[0].mxu0
        %v1101 = vadd.f32 0.0, %v1100
        %v1102 = vpop.f32.mrb[0].mxu0
        %v1103 = vpop.f32.mrb[0].mxu0
        %v1104 = vadd.f32 0.0, %v1103
        %v1105 = vpop.f32.mrb[0].mxu0
        %1106 = vdwg.mxu0
        %s1107 = sld [smem:[#allocation2]]
        %v1108 = vstv %s1107
        %v1109 = vmul.f32 %v1108, %v1045
        %v1110 = vmul.f32 %v1108, %v1048
        %v1111 = vmul.f32 %v1108, %v1053
        %v1112 = vmul.f32 %v1108, %v1056
        %v1113 = vmul.f32 %v1108, %v1061
        %v1114 = vmul.f32 %v1108, %v1064
        %v1115 = vmul.f32 %v1108, %v1069
        %v1116 = vmul.f32 %v1108, %v1072
        %v1117 = vmul.f32 %v1108, %v1077
        %v1118 = vmul.f32 %v1108, %v1080
        %v1119 = vmul.f32 %v1108, %v1085
        %v1120 = vmul.f32 %v1108, %v1088
        %v1121 = vmul.f32 %v1108, %v1093
        %v1122 = vmul.f32 %v1108, %v1096
        %v1123 = vmul.f32 %v1108, %v1101
        %v1124 = vmul.f32 %v1108, %v1104
        %v1125 = vld [vmem:[%s284] sm:$0xff]
        %v1126 = vld [vmem:[%s284 + $0x8] sm:$0xff]
        %v1127 = vld [vmem:[%s284 + $0x10] sm:$0xff]
        %v1128 = vld [vmem:[%s284 + $0x18] sm:$0xff]
        %v1129 = vld [vmem:[%s284 + $0x20] sm:$0xff]
        %v1130 = vld [vmem:[%s284 + $0x28] sm:$0xff]
        %v1131 = vld [vmem:[%s284 + $0x30] sm:$0xff]
        %v1132 = vld [vmem:[%s284 + $0x38] sm:$0xff]
        %v1133 = vld [vmem:[%s284 + $0x40] sm:$0xff]
        %v1134 = vld [vmem:[%s284 + $0x48] sm:$0xff]
        %v1135 = vld [vmem:[%s284 + $0x50] sm:$0xff]
        %v1136 = vld [vmem:[%s284 + $0x58] sm:$0xff]
        %v1137 = vld [vmem:[%s284 + $0x60] sm:$0xff]
        %v1138 = vld [vmem:[%s284 + $0x68] sm:$0xff]
        %v1139 = vld [vmem:[%s284 + $0x70] sm:$0xff]
        %v1140 = vld [vmem:[%s284 + $0x78] sm:$0xff]
        %v1141 = vadd.f32 %v1109, %v1125
        %v1142 = vadd.f32 %v1110, %v1126
        %v1143 = vadd.f32 %v1111, %v1127
        %v1144 = vadd.f32 %v1112, %v1128
        %v1145 = vadd.f32 %v1113, %v1129
        %v1146 = vadd.f32 %v1114, %v1130
        %v1147 = vadd.f32 %v1115, %v1131
        %v1148 = vadd.f32 %v1116, %v1132
        %v1149 = vadd.f32 %v1117, %v1133
        %v1150 = vadd.f32 %v1118, %v1134
        %v1151 = vadd.f32 %v1119, %v1135
        %v1152 = vadd.f32 %v1120, %v1136
        %v1153 = vadd.f32 %v1121, %v1137
        %v1154 = vadd.f32 %v1122, %v1138
        %v1155 = vadd.f32 %v1123, %v1139
        %v1156 = vadd.f32 %v1124, %v1140
        %1157 = vst [vmem:[%s266] sm:$0xff] %v1141
        %1158 = vst [vmem:[%s266 + $0x8] sm:$0xff] %v1142
        %1159 = vst [vmem:[%s266 + $0x10] sm:$0xff] %v1143
        %1160 = vst [vmem:[%s266 + $0x18] sm:$0xff] %v1144
        %1161 = vst [vmem:[%s266 + $0x20] sm:$0xff] %v1145
        %1162 = vst [vmem:[%s266 + $0x28] sm:$0xff] %v1146
        %1163 = vst [vmem:[%s266 + $0x30] sm:$0xff] %v1147
        %1164 = vst [vmem:[%s266 + $0x38] sm:$0xff] %v1148
        %1165 = vst [vmem:[%s266 + $0x40] sm:$0xff] %v1149
        %1166 = vst [vmem:[%s266 + $0x48] sm:$0xff] %v1150
        %1167 = vst [vmem:[%s266 + $0x50] sm:$0xff] %v1151
        %1168 = vst [vmem:[%s266 + $0x58] sm:$0xff] %v1152
        %1169 = vst [vmem:[%s266 + $0x60] sm:$0xff] %v1153
        %1170 = vst [vmem:[%s266 + $0x68] sm:$0xff] %v1154
        %1171 = vst [vmem:[%s266 + $0x70] sm:$0xff] %v1155
        %1172 = vst [vmem:[%s266 + $0x78] sm:$0xff] %v1156
        %s1173 = sand.u32 %s148, 1
        %s1174 = scalar_lea.sflag [#allocation4], %s1173
        %s1175 = sand.u32 %s148, 1
        %s1176 = smul.addr %s1175, 128
        %s1177 = scalar_lea.vmem [#allocation3], %s1176
        %s1178 = sand.u32 %s174, 1
        %s1179 = scalar_lea.sflag [#allocation6], %s1178
        %s1180 = sand.u32 %s174, 1
        %s1181 = smul.addr %s1180, 256
        %s1182 = scalar_lea.vmem [#allocation5], %s1181
        // Predicated region
        $region41: #{self_attention.3} parent=39 // pred_check
          %p1183 = pneg %p158
        $region42: #{self_attention.3} parent=39 // pred_check_branch
          %1185 = sbr.rel (%p1183) target = $region44
        $region43: #{self_attention.3} parent=39 // pred_region
          %s1186 = smul.u32 16, %s25
          %s1188 = ssub.s32 2048, 2048
          %1189 = vsyncadd %s1174, %s1188
          %s1190 = smul.addr %s1186, 128
          %s1191 = scalar_lea.hbm %s5, %s1190
          %s1192 = sshll.u32 %s1177, 4
          %s1193 = int_to_ptr.vmem [resolvable:$true] %s1192
          %1198 = dma.vmem_to_hbm [thread:$0]  %s1193, 2048, %s1191, %s1174, 128, 128, 8
        $region44: #{self_attention.3} parent=39 // pred_fallthru
          _
        // Predicated region
        $region45: #{self_attention.3} parent=39 // pred_check
          %p1199 = pneg %p184
        $region46: #{self_attention.3} parent=39 // pred_check_branch
          %1201 = sbr.rel (%p1199) target = $region48
        $region47: #{self_attention.3} parent=39 // pred_region
          %s1202 = smul.u32 16, %s25
          %s1204 = ssub.s32 4096, 4096
          %1205 = vsyncadd %s1179, %s1204
          %s1206 = smul.addr %s1202, 2
          %s1207 = smul.addr %s1206, 128
          %s1208 = scalar_lea.hbm %s6, %s1207
          %s1209 = sshll.u32 %s1182, 4
          %s1210 = int_to_ptr.vmem [resolvable:$true] %s1209
          %1215 = dma.vmem_to_hbm [thread:$0]  %s1210, 4096, %s1208, %s1179, 256, 256, 16
        $region48: #{self_attention.3} parent=39 // pred_fallthru
          _
      $region40: #{self_attention.3} parent=5 // pred_fallthru
        _
      %p1216 = scmp.le.s32.totalorder 2, %s20
      // Predicated region
      $region49: #{self_attention.3} parent=5 // pred_check
        %p1217 = pneg %p1216
      $region50: #{self_attention.3} parent=5 // pred_check_branch
        %1219 = sbr.rel (%p1217) target = $region52
      $region51: #{self_attention.3} parent=5 // pred_region
        %s1220 = ssub.s32 %s20, 2
        // Predicated region
        $region53: #{self_attention.3} parent=51 // pred_check
          %p1221 = pneg %p164
        $region54: #{self_attention.3} parent=51 // pred_check_branch
          %1223 = sbr.rel (%p1221) target = $region56
        $region55: #{self_attention.3} parent=51 // pred_region
          %s1224 = sand.u32 %s149, 1
          %s1225 = scalar_lea.sflag [#allocation4], %s1224
          %s1226 = sand.u32 %s149, 1
          %s1227 = smul.addr %s1226, 128
          %s1228 = scalar_lea.vmem [#allocation3], %s1227
          %1229 = dma.done %s1225, 2048
        $region56: #{self_attention.3} parent=51 // pred_fallthru
          _
        // Predicated region
        $region57: #{self_attention.3} parent=51 // pred_check
          %p1230 = pneg %p190
        $region58: #{self_attention.3} parent=51 // pred_check_branch
          %1232 = sbr.rel (%p1230) target = $region60
        $region59: #{self_attention.3} parent=51 // pred_region
          %s1233 = sand.u32 %s175, 1
          %s1234 = scalar_lea.sflag [#allocation6], %s1233
          %s1235 = sand.u32 %s175, 1
          %s1236 = smul.addr %s1235, 256
          %s1237 = scalar_lea.vmem [#allocation5], %s1236
          %1238 = dma.done %s1234, 4096
        $region60: #{self_attention.3} parent=51 // pred_fallthru
          _
      $region52: #{self_attention.3} parent=5 // pred_fallthru
        _
    $region6: #{self_attention.3} parent=1 // loop_footer
      %s24 = sadd.s32 1, %s20
    $region7: #{self_attention.3} parent=1 // loop_footer_branch
      %19 = sbr.rel target = $region3
    $region8: #{self_attention.3} parent=1 // loop_exit
      _
    %1239 = vsyncpa [#allocation4], 1
    %s1240 = scalar_lea.sflag [#allocation4], 1
    %1241 = vsyncpa %s1240, 1
    %1242 = vsyncpa [#allocation6], 1
    %s1243 = scalar_lea.sflag [#allocation6], 1
    %1244 = vsyncpa %s1243, 1

</llo_original>
